<compile_context>
chip_gen: v5e
topology: v5e:2x2
jax: 0.10.0
libtpu: 0.0.40
codegen_flags: <defaults>
</compile_context>

<pallas_src>
import functools

import jax
import jax.numpy as jnp
from jax.experimental import pallas as pl
from jax.experimental.pallas import tpu as pltpu


LANE = 128
SUBLANE = 8
NEG_BIG = -1e30     # baked into the last layer's padded bias lanes


def _rup(x, m):
    return (x + m - 1) // m * m


# --------------------------------------------------------------------------
# Kernel
# --------------------------------------------------------------------------
def _mlp_softmax_kernel(x_ref, w_ref, b_ref, bn0_ref, out_ref, *,
                        num_layers, num_out):
    """One (TB, D) batch tile through the whole fused MLP + softmax.

    x_ref  : (TB, D)            f32 raw features (unpadded lane dim)
    w_ref  : (num_layers*F, F)  f32/bf16 folded weights; layer li occupies
                                rows [li*F, li*F + din_li), cols [0, dout_li)
    b_ref  : (8, F)             f32 folded biases (row li = layer li); the
                                last layer's padded lanes hold -1e30 so the
                                softmax denominator ignores them
    bn0_ref: (8, D)             f32; row 0 = BN0 scale, row 1 = BN0 shift
    out_ref: (TB, num_out)      f32 softmax probabilities
    """
    D = x_ref.shape[-1]
    F = w_ref.shape[-1]

    # First BatchNorm1d (eval: per-feature affine) -> ReLU.
    # Dropout (eval) == identity.
    h = jnp.maximum(x_ref[...] * bn0_ref[0:1, :] + bn0_ref[1:2, :], 0.0)

    for li in range(num_layers):
        din = D if li == 0 else F
        w = w_ref[li * F:li * F + din, :]          # static sublane slice
        b = b_ref[li:li + 1, :]                    # (1, F) f32
        # MXU matmul; operands may be bf16, accumulate in f32.
        h = jnp.dot(h.astype(w.dtype), w,
                    preferred_element_type=jnp.float32) + b
        if li < num_layers - 1:
            h = jnp.maximum(h, 0.0)                # ReLU (BN_{li+1} pre-folded)

    # Softmax: padded lanes carry -1e30 from the packed bias -> exp() == 0,
    # so no iota/mask is needed; only the real num_out lanes are stored.
    m = jnp.max(h, axis=-1, keepdims=True)
    p = jnp.exp(h - m)
    denom = jnp.sum(p, axis=-1, keepdims=True)
    p = p * pl.reciprocal(denom, approx=True)      # EUP vrcp
    out_ref[...] = p[:, :num_out]


# --------------------------------------------------------------------------
# Wrapper
# --------------------------------------------------------------------------
def single_class_network_forward(x, wbuf, bbuf, bn0buf, num_out, *,
                                 block_batch=512):
    """Run the fused forward pass.  Buffers come from fold_and_pack_params."""
    B, D = x.shape
    F = wbuf.shape[-1]
    num_layers = wbuf.shape[0] // F
    assert wbuf.shape[0] == num_layers * F
    assert bn0buf.shape[-1] == D

    # Batch tile: multiple of 8 sublanes.  VMEM use at TB=512 is well under
    # the 32 MiB scoped default on v5e/v6e/v7x (re-derive if F grows).
    TB = _rup(min(block_batch, _rup(B, SUBLANE)), SUBLANE)
    Bp = _rup(B, TB)

    xp = x.astype(jnp.float32)
    if Bp != B:                                    # no pad pass when B % TB == 0
        xp = jnp.pad(xp, ((0, Bp - B), (0, 0)))

    out = pl.pallas_call(
        functools.partial(_mlp_softmax_kernel,
                          num_layers=num_layers, num_out=num_out),
        out_shape=jax.ShapeDtypeStruct((Bp, num_out), jnp.float32),
        grid_spec=pltpu.PrefetchScalarGridSpec(
            num_scalar_prefetch=0,
            grid=(Bp // TB,),
            in_specs=[
                pl.BlockSpec((TB, D), lambda i: (i, 0)),        # activations
                pl.BlockSpec(wbuf.shape, lambda i: (0, 0)),     # weights (resident)
                pl.BlockSpec(bbuf.shape, lambda i: (0, 0)),     # folded biases
                pl.BlockSpec(bn0buf.shape, lambda i: (0, 0)),   # BN0 affine
            ],
            out_specs=pl.BlockSpec((TB, num_out), lambda i: (i, 0)),
        ),
        compiler_params=pltpu.CompilerParams(
            dimension_semantics=("parallel",)),                 # megacore on v7x
    )(xp, wbuf, bbuf, bn0buf)

    return out if Bp == B else out[:B]


# --------------------------------------------------------------------------
# Parameter folding / packing (plain JAX glue, done once)
# --------------------------------------------------------------------------
def fold_and_pack_params(raw, dims, *, compute_dtype=jnp.bfloat16, eps=1e-5):
    """Fold eval-mode BatchNorms and pack everything into three VMEM slabs.

    raw["bn"][i]     = (gamma, beta, running_mean, running_var)   (PyTorch)
    raw["linear"][i] = (W of shape (out, in), b of shape (out,))  (PyTorch)
    Returns:
      wbuf   (L*F, F)  compute_dtype  folded weights (MXU operands)
      bbuf   (8,  F)   f32            folded biases; last layer padded lanes = -1e30
      bn0buf (8,  D)   f32            BN0 scale (row 0) / shift (row 1)
    """
    num_layers = len(raw["linear"])
    D = dims[0]
    F = _rup(max(dims), LANE)

    # Every BatchNorm1d (eval) -> per-feature affine y = x*scale + shift.
    scales, shifts = [], []
    for (g, b, m, v) in raw["bn"]:
        s = g / jnp.sqrt(v + eps)
        scales.append(s)
        shifts.append(b - m * s)

    # Transpose Linear weights to (in, out); fold BN_{i+1} into Linear_i:
    #   BN(h @ W + b) = h @ (W * s) + (b * s + t)
    Ws, bs = [], []
    for li, (W, b) in enumerate(raw["linear"]):
        Wt = W.T.astype(jnp.float32)
        bb = b.astype(jnp.float32)
        if li + 1 < len(scales):
            s_next, t_next = scales[li + 1], shifts[li + 1]
            Wt = Wt * s_next[None, :]
            bb = bb * s_next + t_next
        Ws.append(Wt)
        bs.append(bb)

    # Weights slab: layer li at rows [li*F, li*F+din), cols [0, dout);
    # zero padding guarantees padded lanes never contaminate real outputs.
    wbuf = jnp.zeros((num_layers * F, F), jnp.float32)
    for li, Wt in enumerate(Ws):
        din, dout = Wt.shape
        wbuf = wbuf.at[li * F:li * F + din, :dout].set(Wt)

    # Bias slab: row li = folded bias of layer li.  For the last layer the
    # padded lanes are set to -1e30 so the in-kernel softmax denominator
    # ignores them without any explicit masking.
    bbuf = jnp.zeros((_rup(num_layers, SUBLANE), F), jnp.float32)
    for li, bb in enumerate(bs):
        if li == num_layers - 1:
            row = jnp.full((F,), NEG_BIG, jnp.float32).at[:bb.shape[0]].set(bb)
        else:
            row = jnp.zeros((F,), jnp.float32).at[:bb.shape[0]].set(bb)
        bbuf = bbuf.at[li].set(row)

    # BN0 affine (applied to raw x inside the kernel), unpadded lane dim D.
    bn0buf = jnp.zeros((SUBLANE, D), jnp.float32)
    bn0buf = bn0buf.at[0, :].set(scales[0])
    bn0buf = bn0buf.at[1, :].set(shifts[0])

    return wbuf.astype(compute_dtype), bbuf, bn0buf


def make_raw_params(key, data_shape, num_intensities, h1, h2, h3, h4):
    """Random PyTorch-layout parameters for the 5 BN + 5 Linear layers."""
    dims = [data_shape, h1, h2, h3, h4, num_intensities]
    bn, linear = [], []
    for li in range(5):
        fan_in, fan_out = dims[li], dims[li + 1]
        key, kg, kb, km, kv, kw, kbi = jax.random.split(key, 7)
        gamma = 1.0 + 0.1 * jax.random.normal(kg, (fan_in,), jnp.float32)
        beta = 0.1 * jax.random.normal(kb, (fan_in,), jnp.float32)
        rmean = 0.1 * jax.random.normal(km, (fan_in,), jnp.float32)
        rvar = jnp.abs(jax.random.normal(kv, (fan_in,), jnp.float32)) + 0.5
        bound = 1.0 / jnp.sqrt(jnp.float32(fan_in))
        W = jax.random.uniform(kw, (fan_out, fan_in), jnp.float32, -bound, bound)
        b = jax.random.uniform(kbi, (fan_out,), jnp.float32, -bound, bound)
        bn.append((gamma, beta, rmean, rvar))
        linear.append((W, b))
    return {"bn": bn, "linear": linear}, dims


def reference_forward(x, raw, eps=1e-5):
    """Pure-JAX mirror of SingleClassNetwork.forward in eval mode."""
    h = x.astype(jnp.float32)
    for li in range(len(raw["linear"])):
        g, b, m, v = raw["bn"][li]
        h = (h - m) / jnp.sqrt(v + eps) * g + b      # BatchNorm1d (running stats)
        h = jnp.maximum(h, 0.0)                       # ReLU; Dropout(eval)=id
        W, bias = raw["linear"][li]
        h = h @ W.T + bias                            # nn.Linear
    return jax.nn.softmax(h, axis=1)


# TODO(synk): training-mode BatchNorm (batch statistics) and stochastic
# Dropout are not implemented; this kernel reproduces eval-mode inference.

if __name__ == "__main__":
    # Shapes consistent with the module's constructor; batch large enough to
    # exercise the batch grid (2 even steps -> both v7x TensorCores busy).
    batch = 1024
    data_shape = 32
    fc_hidden_dim_1, fc_hidden_dim_2 = 32, 32
    fc_hidden_dim_3, fc_hidden_dim_4 = 16, 16
    num_intensities = 8

    key = jax.random.PRNGKey(0)
    key, kx = jax.random.split(key)
    x = jax.random.normal(kx, (batch, data_shape), jnp.float32)
    raw, dims = make_raw_params(key, data_shape, num_intensities,
                                fc_hidden_dim_1, fc_hidden_dim_2,
                                fc_hidden_dim_3, fc_hidden_dim_4)

    ref = reference_forward(x, raw)

    # bf16 MXU operands, f32 accumulation + f32 elementwise/softmax:
    # recommended on all generations (v5e MXU is bf16-native too).
    wbuf, bbuf, bn0buf = fold_and_pack_params(raw, dims,
                                              compute_dtype=jnp.bfloat16)
    out = single_class_network_forward(x, wbuf, bbuf, bn0buf, num_intensities,
                                       block_batch=512)
    out = jax.block_until_ready(out)
    assert out.shape == (batch, num_intensities)
    assert jnp.allclose(out, ref, atol=0.05, rtol=0.05)
    assert jnp.allclose(jnp.sum(out, axis=1), 1.0, atol=1e-2)

    # f32 MXU operands (tightest numerics; use if bf16 rounding matters).
    wbuf32, bbuf32, bn0buf32 = fold_and_pack_params(raw, dims,
                                                    compute_dtype=jnp.float32)
    out32 = single_class_network_forward(x, wbuf32, bbuf32, bn0buf32,
                                         num_intensities, block_batch=512)
    out32 = jax.block_until_ready(out32)
    assert out32.shape == (batch, num_intensities)
    assert jnp.allclose(out32, ref, atol=1e-2, rtol=1e-2)
    assert jnp.allclose(jnp.sum(out32, axis=1), 1.0, atol=1e-2)

    print("KERNEL_OK")
</pallas_src>

<mosaic_0001>
module attributes {stable_mosaic.version = 11 : i64} {
  func.func @_mlp_softmax_kernel(%arg0: i32, %arg1: memref<512x32xf32, #tpu.memory_space<vmem>>, %arg2: memref<640x128xbf16, #tpu.memory_space<vmem>>, %arg3: memref<8x128xf32, #tpu.memory_space<vmem>>, %arg4: memref<8x32xf32, #tpu.memory_space<vmem>>, %arg5: memref<512x8xf32, #tpu.memory_space<vmem>>) attributes {dimension_semantics = [#tpu.dimension_semantics<parallel>], iteration_bounds = array<i64: 2>, scalar_prefetch = 0 : i64, scratch_operands = 0 : i64, tpu.core_type = #tpu.core_type<tc>, window_params = [{transform_indices = @transform_0, window_bounds = array<i64: 512, 32>}, {pipeline_mode = #tpu.pipeline_mode<synchronous>, transform_indices = @transform_1, window_bounds = array<i64: 640, 128>}, {pipeline_mode = #tpu.pipeline_mode<synchronous>, transform_indices = @transform_2, window_bounds = array<i64: 8, 128>}, {pipeline_mode = #tpu.pipeline_mode<synchronous>, transform_indices = @transform_3, window_bounds = array<i64: 8, 32>}, {transform_indices = @transform_4, window_bounds = array<i64: 512, 8>}]} {
    %c0 = arith.constant 0 : index
    %c0_0 = arith.constant 0 : index
    %0 = vector.load %arg1[%c0, %c0_0] : memref<512x32xf32, #tpu.memory_space<vmem>>, vector<512x32xf32>
    %c0_1 = arith.constant 0 : index
    %c0_2 = arith.constant 0 : index
    %1 = vector.load %arg4[%c0_1, %c0_2] : memref<8x32xf32, #tpu.memory_space<vmem>>, vector<1x32xf32>
    %2 = vector.broadcast %1 : vector<1x32xf32> to vector<512x32xf32>
    %3 = arith.mulf %0, %2 : vector<512x32xf32>
    %c1 = arith.constant 1 : index
    %c0_3 = arith.constant 0 : index
    %4 = vector.load %arg4[%c1, %c0_3] : memref<8x32xf32, #tpu.memory_space<vmem>>, vector<1x32xf32>
    %5 = vector.broadcast %4 : vector<1x32xf32> to vector<512x32xf32>
    %6 = arith.addf %3, %5 : vector<512x32xf32>
    %cst = arith.constant 0.000000e+00 : f32
    %7 = vector.broadcast %cst : f32 to vector<512x32xf32>
    %8 = arith.maximumf %6, %7 : vector<512x32xf32>
    %c0_4 = arith.constant 0 : index
    %c0_5 = arith.constant 0 : index
    %9 = vector.load %arg2[%c0_4, %c0_5] : memref<640x128xbf16, #tpu.memory_space<vmem>>, vector<32x128xbf16>
    %c0_6 = arith.constant 0 : index
    %c0_7 = arith.constant 0 : index
    %10 = vector.load %arg3[%c0_6, %c0_7] : memref<8x128xf32, #tpu.memory_space<vmem>>, vector<1x128xf32>
    %11 = arith.truncf %8 : vector<512x32xf32> to vector<512x32xbf16>
    %cst_8 = arith.constant dense<0.000000e+00> : vector<512x128xf32>
    %12 = tpu.matmul %11, %9, %cst_8 {dimension_numbers = #tpu.dot_dimension_numbers<[1], [0], [0], [1], [0, 0, 1, 1], [], []>} : vector<512x32xbf16>, vector<32x128xbf16>, vector<512x128xf32> -> vector<512x128xf32>
    %13 = vector.broadcast %10 : vector<1x128xf32> to vector<512x128xf32>
    %14 = arith.addf %12, %13 : vector<512x128xf32>
    %cst_9 = arith.constant 0.000000e+00 : f32
    %15 = vector.broadcast %cst_9 : f32 to vector<512x128xf32>
    %16 = arith.maximumf %14, %15 : vector<512x128xf32>
    %c128 = arith.constant 128 : index
    %c0_10 = arith.constant 0 : index
    %17 = vector.load %arg2[%c128, %c0_10] : memref<640x128xbf16, #tpu.memory_space<vmem>>, vector<128x128xbf16>
    %c1_11 = arith.constant 1 : index
    %c0_12 = arith.constant 0 : index
    %18 = vector.load %arg3[%c1_11, %c0_12] : memref<8x128xf32, #tpu.memory_space<vmem>>, vector<1x128xf32>
    %19 = arith.truncf %16 : vector<512x128xf32> to vector<512x128xbf16>
    %cst_13 = arith.constant dense<0.000000e+00> : vector<512x128xf32>
    %20 = tpu.matmul %19, %17, %cst_13 {dimension_numbers = #tpu.dot_dimension_numbers<[1], [0], [0], [1], [0, 0, 1, 1], [], []>} : vector<512x128xbf16>, vector<128x128xbf16>, vector<512x128xf32> -> vector<512x128xf32>
    %21 = vector.broadcast %18 : vector<1x128xf32> to vector<512x128xf32>
    %22 = arith.addf %20, %21 : vector<512x128xf32>
    %cst_14 = arith.constant 0.000000e+00 : f32
    %23 = vector.broadcast %cst_14 : f32 to vector<512x128xf32>
    %24 = arith.maximumf %22, %23 : vector<512x128xf32>
    %c256 = arith.constant 256 : index
    %c0_15 = arith.constant 0 : index
    %25 = vector.load %arg2[%c256, %c0_15] : memref<640x128xbf16, #tpu.memory_space<vmem>>, vector<128x128xbf16>
    %c2 = arith.constant 2 : index
    %c0_16 = arith.constant 0 : index
    %26 = vector.load %arg3[%c2, %c0_16] : memref<8x128xf32, #tpu.memory_space<vmem>>, vector<1x128xf32>
    %27 = arith.truncf %24 : vector<512x128xf32> to vector<512x128xbf16>
    %cst_17 = arith.constant dense<0.000000e+00> : vector<512x128xf32>
    %28 = tpu.matmul %27, %25, %cst_17 {dimension_numbers = #tpu.dot_dimension_numbers<[1], [0], [0], [1], [0, 0, 1, 1], [], []>} : vector<512x128xbf16>, vector<128x128xbf16>, vector<512x128xf32> -> vector<512x128xf32>
    %29 = vector.broadcast %26 : vector<1x128xf32> to vector<512x128xf32>
    %30 = arith.addf %28, %29 : vector<512x128xf32>
    %cst_18 = arith.constant 0.000000e+00 : f32
    %31 = vector.broadcast %cst_18 : f32 to vector<512x128xf32>
    %32 = arith.maximumf %30, %31 : vector<512x128xf32>
    %c384 = arith.constant 384 : index
    %c0_19 = arith.constant 0 : index
    %33 = vector.load %arg2[%c384, %c0_19] : memref<640x128xbf16, #tpu.memory_space<vmem>>, vector<128x128xbf16>
    %c3 = arith.constant 3 : index
    %c0_20 = arith.constant 0 : index
    %34 = vector.load %arg3[%c3, %c0_20] : memref<8x128xf32, #tpu.memory_space<vmem>>, vector<1x128xf32>
    %35 = arith.truncf %32 : vector<512x128xf32> to vector<512x128xbf16>
    %cst_21 = arith.constant dense<0.000000e+00> : vector<512x128xf32>
    %36 = tpu.matmul %35, %33, %cst_21 {dimension_numbers = #tpu.dot_dimension_numbers<[1], [0], [0], [1], [0, 0, 1, 1], [], []>} : vector<512x128xbf16>, vector<128x128xbf16>, vector<512x128xf32> -> vector<512x128xf32>
    %37 = vector.broadcast %34 : vector<1x128xf32> to vector<512x128xf32>
    %38 = arith.addf %36, %37 : vector<512x128xf32>
    %cst_22 = arith.constant 0.000000e+00 : f32
    %39 = vector.broadcast %cst_22 : f32 to vector<512x128xf32>
    %40 = arith.maximumf %38, %39 : vector<512x128xf32>
    %c512 = arith.constant 512 : index
    %c0_23 = arith.constant 0 : index
    %41 = vector.load %arg2[%c512, %c0_23] : memref<640x128xbf16, #tpu.memory_space<vmem>>, vector<128x128xbf16>
    %c4 = arith.constant 4 : index
    %c0_24 = arith.constant 0 : index
    %42 = vector.load %arg3[%c4, %c0_24] : memref<8x128xf32, #tpu.memory_space<vmem>>, vector<1x128xf32>
    %43 = arith.truncf %40 : vector<512x128xf32> to vector<512x128xbf16>
    %cst_25 = arith.constant dense<0.000000e+00> : vector<512x128xf32>
    %44 = tpu.matmul %43, %41, %cst_25 {dimension_numbers = #tpu.dot_dimension_numbers<[1], [0], [0], [1], [0, 0, 1, 1], [], []>} : vector<512x128xbf16>, vector<128x128xbf16>, vector<512x128xf32> -> vector<512x128xf32>
    %45 = vector.broadcast %42 : vector<1x128xf32> to vector<512x128xf32>
    %46 = arith.addf %44, %45 : vector<512x128xf32>
    %cst_26 = arith.constant dense<0xFF800000> : vector<512xf32>
    %47 = vector.multi_reduction <maximumf>, %46, %cst_26 [1] : vector<512x128xf32> to vector<512xf32>
    %48 = vector.shape_cast %47 : vector<512xf32> to vector<512x1xf32>
    %49 = vector.broadcast %48 : vector<512x1xf32> to vector<512x128xf32>
    %50 = arith.subf %46, %49 : vector<512x128xf32>
    %51 = math.exp %50 : vector<512x128xf32>
    %cst_27 = arith.constant dense<0.000000e+00> : vector<512xf32>
    %52 = vector.multi_reduction <add>, %51, %cst_27 [1] : vector<512x128xf32> to vector<512xf32>
    %53 = vector.shape_cast %52 : vector<512xf32> to vector<512x1xf32>
    %54 = tpu.reciprocal %53 {approx = true} : vector<512x1xf32> -> vector<512x1xf32>
    %55 = vector.broadcast %54 : vector<512x1xf32> to vector<512x128xf32>
    %56 = arith.mulf %51, %55 : vector<512x128xf32>
    %57 = vector.extract_strided_slice %56 {offsets = [0, 0], sizes = [512, 8], strides = [1, 1]} : vector<512x128xf32> to vector<512x8xf32>
    %c0_28 = arith.constant 0 : index
    %c0_29 = arith.constant 0 : index
    %58 = vector.load %arg5[%c0_28, %c0_29] : memref<512x8xf32, #tpu.memory_space<vmem>>, vector<512x8xf32>
    tpu.vector_store %arg5[%c0_28, %c0_29], %57 {strides = array<i32>} : memref<512x8xf32, #tpu.memory_space<vmem>>, vector<512x8xf32>,
    return
  }
  func.func @transform_0(%arg0: i32) -> (i32, i32) {
    %c0_i32 = arith.constant 0 : i32
    %c0_i32_0 = arith.constant 0 : i32
    return %arg0, %c0_i32 : i32, i32
  }
  func.func @transform_1(%arg0: i32) -> (i32, i32) {
    %c0_i32 = arith.constant 0 : i32
    %c0_i32_0 = arith.constant 0 : i32
    %c0_i32_1 = arith.constant 0 : i32
    return %c0_i32, %c0_i32_0 : i32, i32
  }
  func.func @transform_2(%arg0: i32) -> (i32, i32) {
    %c0_i32 = arith.constant 0 : i32
    %c0_i32_0 = arith.constant 0 : i32
    %c0_i32_1 = arith.constant 0 : i32
    return %c0_i32, %c0_i32_0 : i32, i32
  }
  func.func @transform_3(%arg0: i32) -> (i32, i32) {
    %c0_i32 = arith.constant 0 : i32
    %c0_i32_0 = arith.constant 0 : i32
    %c0_i32_1 = arith.constant 0 : i32
    return %c0_i32, %c0_i32_0 : i32, i32
  }
  func.func @transform_4(%arg0: i32) -> (i32, i32) {
    %c0_i32 = arith.constant 0 : i32
    %c0_i32_0 = arith.constant 0 : i32
    return %arg0, %c0_i32 : i32, i32
  }
}

</mosaic_0001>

<llo_original>
// kernel: tpu_custom_call.1
$region0: #{tpu_custom_call.1}
  #allocation0 [shape = 'u32[]', space=smem, size = 0x4, offset = 0x4, fixed_abs, tag = 'smem constant byte address 0x4 - core index']
  #allocation1 [shape = 'u32[72,128]{1,0:T(1,128)}', space=vmem, size = 0x9000, scoped, tag = 'internal scratch']
  %s0 = inlined_call_operand.vmem [shape: f32[1024,32], index: 0, kind: input, shape index: {}]
  %s1 = inlined_call_operand.vmem [shape: bf16[640,128], index: 1, kind: input, shape index: {}]
  %s2 = inlined_call_operand.vmem [shape: f32[8,128], index: 2, kind: input, shape index: {}]
  %s3 = inlined_call_operand.vmem [shape: f32[8,32], index: 3, kind: input, shape index: {}]
  %s4 = inlined_call_operand.vmem [shape: f32[1024,8], index: 4, kind: output, shape index: {}]
  %s5 = sld [smem:[#allocation0]]
  $region49: #{tpu_custom_call.1} parent=0
    _
  %s7 = ssub.s32 1, %s5
  %s8 = scalar_select 0, %s7, %s5
  loop: start=0, step=1, limit=4
  $region2: #{tpu_custom_call.1} parent=0 // loop_pre_header
    _
  $region3: #{tpu_custom_call.1} parent=0 // loop_header
    %s10 = sphi 0, %s14
    %p11 = scmp.ge.s32.totalorder %s10, 4
    %s20 = sphi 0, %s22
    %s23 = sphi 0, %s20
    %s24 = sphi 0, %s23
    %s40 = sphi 0, %s24
    %s44 = sphi 0, %s44
    %s46 = sphi 0, %s44
    %s47 = sphi 0, %s46
    %s61 = sphi 0, %s47
    %s65 = sphi 0, %s65
    %s67 = sphi 0, %s65
    %s68 = sphi 0, %s67
    %s82 = sphi 0, %s68
    %s86 = sphi 0, %s86
    %s88 = sphi 0, %s86
    %s89 = sphi 0, %s88
    %s103 = sphi 0, %s89
    %s109 = sphi 0, %s111
    %s112 = sphi 0, %s109
    %s113 = sphi 0, %s112
    %s129 = sphi 0, %s113
  $region4: #{tpu_custom_call.1} parent=0 // loop_header_branch
    %13 = sbr.rel (%p11) target = $region8
  $region5: #{tpu_custom_call.1} parent=0 // loop_body
    %s15 = ssub.s32 %s10, 1
    %s16 = ssub.s32 %s10, 2
    %s17 = sadd.s32 %s10, 1
    %s18 = ssub.s32 %s10, %s17
    %p19 = scmp.eq.s32.totalorder %s18, 0
    %s21 = sadd.s32 %s20, 1
    %s22 = scalar_select %p19, %s20, %s21
    %p25 = pneg %p19
    %p26 = scmp.eq.s32.totalorder %s10, 1
    %p27 = por %p25, %p26
    %p28 = scmp.ne.s32.totalorder %s20, %s23
    %p29 = scmp.eq.s32.totalorder %s10, 0
    %p30 = por %p28, %p29
    %p31 = scmp.ne.s32.totalorder %s20, %s23
    %p32 = scmp.eq.s32.totalorder %s15, 1
    %p33 = por %p31, %p32
    %p34 = scmp.ne.s32.totalorder %s23, %s24
    %p35 = scmp.eq.s32.totalorder %s15, 0
    %p36 = por %p34, %p35
    %p37 = scmp.ne.s32.totalorder %s23, %s24
    %p38 = scmp.eq.s32.totalorder %s16, 1
    %p39 = por %p37, %p38
    %p41 = scmp.ne.s32.totalorder %s24, %s40
    %p42 = scmp.eq.s32.totalorder %s16, 0
    %p43 = por %p41, %p42
    %s45 = sadd.s32 %s44, 1
    %p48 = scmp.eq.s32.totalorder %s10, 1
    %p49 = scmp.ne.s32.totalorder %s44, %s46
    %p50 = scmp.eq.s32.totalorder %s10, 0
    %p51 = por %p49, %p50
    %p52 = scmp.ne.s32.totalorder %s44, %s46
    %p53 = scmp.eq.s32.totalorder %s15, 1
    %p54 = por %p52, %p53
    %p55 = scmp.ne.s32.totalorder %s46, %s47
    %p56 = scmp.eq.s32.totalorder %s15, 0
    %p57 = por %p55, %p56
    %p58 = scmp.ne.s32.totalorder %s46, %s47
    %p59 = scmp.eq.s32.totalorder %s16, 1
    %p60 = por %p58, %p59
    %p62 = scmp.ne.s32.totalorder %s47, %s61
    %p63 = scmp.eq.s32.totalorder %s16, 0
    %p64 = por %p62, %p63
    %s66 = sadd.s32 %s65, 1
    %p69 = scmp.eq.s32.totalorder %s10, 1
    %p70 = scmp.ne.s32.totalorder %s65, %s67
    %p71 = scmp.eq.s32.totalorder %s10, 0
    %p72 = por %p70, %p71
    %p73 = scmp.ne.s32.totalorder %s65, %s67
    %p74 = scmp.eq.s32.totalorder %s15, 1
    %p75 = por %p73, %p74
    %p76 = scmp.ne.s32.totalorder %s67, %s68
    %p77 = scmp.eq.s32.totalorder %s15, 0
    %p78 = por %p76, %p77
    %p79 = scmp.ne.s32.totalorder %s67, %s68
    %p80 = scmp.eq.s32.totalorder %s16, 1
    %p81 = por %p79, %p80
    %p83 = scmp.ne.s32.totalorder %s68, %s82
    %p84 = scmp.eq.s32.totalorder %s16, 0
    %p85 = por %p83, %p84
    %s87 = sadd.s32 %s86, 1
    %p90 = scmp.eq.s32.totalorder %s10, 1
    %p91 = scmp.ne.s32.totalorder %s86, %s88
    %p92 = scmp.eq.s32.totalorder %s10, 0
    %p93 = por %p91, %p92
    %p94 = scmp.ne.s32.totalorder %s86, %s88
    %p95 = scmp.eq.s32.totalorder %s15, 1
    %p96 = por %p94, %p95
    %p97 = scmp.ne.s32.totalorder %s88, %s89
    %p98 = scmp.eq.s32.totalorder %s15, 0
    %p99 = por %p97, %p98
    %p100 = scmp.ne.s32.totalorder %s88, %s89
    %p101 = scmp.eq.s32.totalorder %s16, 1
    %p102 = por %p100, %p101
    %p104 = scmp.ne.s32.totalorder %s89, %s103
    %p105 = scmp.eq.s32.totalorder %s16, 0
    %p106 = por %p104, %p105
    %s107 = ssub.s32 %s10, %s17
    %p108 = scmp.eq.s32.totalorder %s107, 0
    %s110 = sadd.s32 %s109, 1
    %s111 = scalar_select %p108, %s109, %s110
    %p114 = pneg %p108
    %p115 = scmp.eq.s32.totalorder %s10, 1
    %p116 = por %p114, %p115
    %p117 = scmp.ne.s32.totalorder %s109, %s112
    %p118 = scmp.eq.s32.totalorder %s10, 0
    %p119 = por %p117, %p118
    %p120 = scmp.ne.s32.totalorder %s109, %s112
    %p121 = scmp.eq.s32.totalorder %s15, 1
    %p122 = por %p120, %p121
    %p123 = scmp.ne.s32.totalorder %s112, %s113
    %p124 = scmp.eq.s32.totalorder %s15, 0
    %p125 = por %p123, %p124
    %p126 = scmp.ne.s32.totalorder %s112, %s113
    %p127 = scmp.eq.s32.totalorder %s16, 1
    %p128 = por %p126, %p127
    %p130 = scmp.ne.s32.totalorder %s113, %s129
    %p131 = scmp.eq.s32.totalorder %s16, 0
    %p132 = por %p130, %p131
    %p133 = scmp.le.s32.totalorder 1, %s10
    %p134 = scmp.lt.s32.totalorder %s10, 3
    %p135 = pnand %p133, %p134
    %p136 = pneg %p135
    // Predicated region
    $region9: #{tpu_custom_call.1} parent=5 // pred_check
      _
    $region10: #{tpu_custom_call.1} parent=5 // pred_check_branch
      %138 = sbr.rel (%p135) target = $region12
    $region11: #{tpu_custom_call.1} parent=5 // pred_region
      %s139 = ssub.s32 %s10, 1
      // Predicated region
      $region13: #{tpu_custom_call.1} parent=11 // pred_check
        %p140 = pneg %p57
      $region14: #{tpu_custom_call.1} parent=11 // pred_check_branch
        %142 = sbr.rel (%p140) target = $region16
      $region15: #{tpu_custom_call.1} parent=11 // pred_region
        _
      $region16: #{tpu_custom_call.1} parent=11 // pred_fallthru
        _
      // Predicated region
      $region17: #{tpu_custom_call.1} parent=11 // pred_check
        %p143 = pneg %p78
      $region18: #{tpu_custom_call.1} parent=11 // pred_check_branch
        %145 = sbr.rel (%p143) target = $region20
      $region19: #{tpu_custom_call.1} parent=11 // pred_region
        _
      $region20: #{tpu_custom_call.1} parent=11 // pred_fallthru
        _
      // Predicated region
      $region21: #{tpu_custom_call.1} parent=11 // pred_check
        %p146 = pneg %p99
      $region22: #{tpu_custom_call.1} parent=11 // pred_check_branch
        %148 = sbr.rel (%p146) target = $region24
      $region23: #{tpu_custom_call.1} parent=11 // pred_region
        _
      $region24: #{tpu_custom_call.1} parent=11 // pred_fallthru
        _
    $region12: #{tpu_custom_call.1} parent=5 // pred_fallthru
      _
    %p149 = scmp.lt.s32.totalorder %s10, 2
    // Predicated region
    $region25: #{tpu_custom_call.1} parent=5 // pred_check
      %p150 = pneg %p149
    $region26: #{tpu_custom_call.1} parent=5 // pred_check_branch
      %152 = sbr.rel (%p150) target = $region28
    $region27: #{tpu_custom_call.1} parent=5 // pred_region
      // Predicated region
      $region29: #{tpu_custom_call.1} parent=27 // pred_check
        %p153 = pneg %p30
      $region30: #{tpu_custom_call.1} parent=27 // pred_check_branch
        %155 = sbr.rel (%p153) target = $region32
      $region31: #{tpu_custom_call.1} parent=27 // pred_region
        %s156 = smul.u32 64, %s10
        %p157 = scmp.lt.s32.totalorder %s156, 127
        %s158 = scalar_select %p157, %s156, 127
        %s159 = smul.addr %s158, 8
        %s160 = scalar_lea.vmem %s0, %s159
        %s161 = smul.u32 64, %s10
      $region32: #{tpu_custom_call.1} parent=27 // pred_fallthru
        _
    $region28: #{tpu_custom_call.1} parent=5 // pred_fallthru
      _
    %p162 = scmp.le.s32.totalorder 1, %s10
    %p163 = scmp.lt.s32.totalorder %s10, 3
    %p164 = pnand %p162, %p163
    %p165 = pneg %p164
    // Predicated region
    $region33: #{tpu_custom_call.1} parent=5 // pred_check
      _
    $region34: #{tpu_custom_call.1} parent=5 // pred_check_branch
      %167 = sbr.rel (%p164) target = $region36
    $region35: #{tpu_custom_call.1} parent=5 // pred_region
      %s168 = ssub.s32 %s10, 1
      %s169 = smul.u32 64, %s15
      %p170 = scmp.lt.s32.totalorder %s169, 127
      %s171 = scalar_select %p170, %s169, 127
      %s172 = smul.addr %s171, 8
      %s173 = scalar_lea.vmem %s0, %s172
      %p174 = pneg %p36
      %p175 = pneg %p33
      %p176 = pneg %p57
      %p177 = pneg %p54
      %p178 = pneg %p78
      %p179 = pneg %p75
      %p180 = pneg %p99
      %p181 = pneg %p96
      %p182 = pneg %p125
      %p183 = pneg %p122
      %s184 = smul.u32 64, %s15
      %p185 = scmp.lt.s32.totalorder %s184, 127
      %s186 = scalar_select %p185, %s184, 127
      %s187 = smul.addr %s186, 8
      %s188 = scalar_lea.vmem %s4, %s187
      %s189 = smul.u32 64, %s15
      %p190 = scmp.lt.s32.totalorder %s189, 127
      %s191 = scalar_select %p190, %s189, 127
      %s192 = smul.addr %s191, 8
      %s193 = scalar_lea.vmem %s0, %s192
      %s194 = smul.u32 64, %s15
      %s195 = smul.u32 64, %s15
      %p196 = scmp.lt.s32.totalorder %s195, 127
      %s197 = scalar_select %p196, %s195, 127
      %s198 = smul.addr %s197, 8
      %s199 = scalar_lea.vmem %s4, %s198
      %s200 = smul.u32 64, %s15
      %v202 = vld [vmem:[%s193] sm:$0xff]
      %v203 = vld [vmem:[%s193 + $0x8] sm:$0xff]
      %v204 = vld [vmem:[%s193 + $0x10] sm:$0xff]
      %v205 = vld [vmem:[%s193 + $0x18] sm:$0xff]
      %v206 = vld [vmem:[%s193 + $0x20] sm:$0xff]
      %v207 = vld [vmem:[%s193 + $0x28] sm:$0xff]
      %v208 = vld [vmem:[%s193 + $0x30] sm:$0xff]
      %v209 = vld [vmem:[%s193 + $0x38] sm:$0xff]
      %v210 = vld [vmem:[%s193 + $0x40] sm:$0xff]
      %v211 = vld [vmem:[%s193 + $0x48] sm:$0xff]
      %v212 = vld [vmem:[%s193 + $0x50] sm:$0xff]
      %v213 = vld [vmem:[%s193 + $0x58] sm:$0xff]
      %v214 = vld [vmem:[%s193 + $0x60] sm:$0xff]
      %v215 = vld [vmem:[%s193 + $0x68] sm:$0xff]
      %v216 = vld [vmem:[%s193 + $0x70] sm:$0xff]
      %v217 = vld [vmem:[%s193 + $0x78] sm:$0xff]
      %v218 = vld [vmem:[%s193 + $0x80] sm:$0xff]
      %v219 = vld [vmem:[%s193 + $0x88] sm:$0xff]
      %v220 = vld [vmem:[%s193 + $0x90] sm:$0xff]
      %v221 = vld [vmem:[%s193 + $0x98] sm:$0xff]
      %v222 = vld [vmem:[%s193 + $0xa0] sm:$0xff]
      %v223 = vld [vmem:[%s193 + $0xa8] sm:$0xff]
      %v224 = vld [vmem:[%s193 + $0xb0] sm:$0xff]
      %v225 = vld [vmem:[%s193 + $0xb8] sm:$0xff]
      %v226 = vld [vmem:[%s193 + $0xc0] sm:$0xff]
      %v227 = vld [vmem:[%s193 + $0xc8] sm:$0xff]
      %v228 = vld [vmem:[%s193 + $0xd0] sm:$0xff]
      %v229 = vld [vmem:[%s193 + $0xd8] sm:$0xff]
      %v230 = vld [vmem:[%s193 + $0xe0] sm:$0xff]
      %v231 = vld [vmem:[%s193 + $0xe8] sm:$0xff]
      %v232 = vld [vmem:[%s193 + $0xf0] sm:$0xff]
      %v233 = vld [vmem:[%s193 + $0xf8] sm:$0xff]
      %v234 = vld [vmem:[%s193 + $0x100] sm:$0xff]
      %v235 = vld [vmem:[%s193 + $0x108] sm:$0xff]
      %v236 = vld [vmem:[%s193 + $0x110] sm:$0xff]
      %v237 = vld [vmem:[%s193 + $0x118] sm:$0xff]
      %v238 = vld [vmem:[%s193 + $0x120] sm:$0xff]
      %v239 = vld [vmem:[%s193 + $0x128] sm:$0xff]
      %v240 = vld [vmem:[%s193 + $0x130] sm:$0xff]
      %v241 = vld [vmem:[%s193 + $0x138] sm:$0xff]
      %v242 = vld [vmem:[%s193 + $0x140] sm:$0xff]
      %v243 = vld [vmem:[%s193 + $0x148] sm:$0xff]
      %v244 = vld [vmem:[%s193 + $0x150] sm:$0xff]
      %v245 = vld [vmem:[%s193 + $0x158] sm:$0xff]
      %v246 = vld [vmem:[%s193 + $0x160] sm:$0xff]
      %v247 = vld [vmem:[%s193 + $0x168] sm:$0xff]
      %v248 = vld [vmem:[%s193 + $0x170] sm:$0xff]
      %v249 = vld [vmem:[%s193 + $0x178] sm:$0xff]
      %v250 = vld [vmem:[%s193 + $0x180] sm:$0xff]
      %v251 = vld [vmem:[%s193 + $0x188] sm:$0xff]
      %v252 = vld [vmem:[%s193 + $0x190] sm:$0xff]
      %v253 = vld [vmem:[%s193 + $0x198] sm:$0xff]
      %v254 = vld [vmem:[%s193 + $0x1a0] sm:$0xff]
      %v255 = vld [vmem:[%s193 + $0x1a8] sm:$0xff]
      %v256 = vld [vmem:[%s193 + $0x1b0] sm:$0xff]
      %v257 = vld [vmem:[%s193 + $0x1b8] sm:$0xff]
      %v258 = vld [vmem:[%s193 + $0x1c0] sm:$0xff]
      %v259 = vld [vmem:[%s193 + $0x1c8] sm:$0xff]
      %v260 = vld [vmem:[%s193 + $0x1d0] sm:$0xff]
      %v261 = vld [vmem:[%s193 + $0x1d8] sm:$0xff]
      %v262 = vld [vmem:[%s193 + $0x1e0] sm:$0xff]
      %v263 = vld [vmem:[%s193 + $0x1e8] sm:$0xff]
      %v264 = vld [vmem:[%s193 + $0x1f0] sm:$0xff]
      %v265 = vld [vmem:[%s193 + $0x1f8] sm:$0xff]
      %v266 = vld [vmem:[%s3] sm:$0x1]
      %v267 = vperm.slane %v266, 0
      %v268 = vmul.f32 %v202, %v267
      %v269 = vmul.f32 %v203, %v267
      %v270 = vmul.f32 %v204, %v267
      %v271 = vmul.f32 %v205, %v267
      %v272 = vmul.f32 %v206, %v267
      %v273 = vmul.f32 %v207, %v267
      %v274 = vmul.f32 %v208, %v267
      %v275 = vmul.f32 %v209, %v267
      %v276 = vmul.f32 %v210, %v267
      %v277 = vmul.f32 %v211, %v267
      %v278 = vmul.f32 %v212, %v267
      %v279 = vmul.f32 %v213, %v267
      %v280 = vmul.f32 %v214, %v267
      %v281 = vmul.f32 %v215, %v267
      %v282 = vmul.f32 %v216, %v267
      %v283 = vmul.f32 %v217, %v267
      %v284 = vmul.f32 %v218, %v267
      %v285 = vmul.f32 %v219, %v267
      %v286 = vmul.f32 %v220, %v267
      %v287 = vmul.f32 %v221, %v267
      %v288 = vmul.f32 %v222, %v267
      %v289 = vmul.f32 %v223, %v267
      %v290 = vmul.f32 %v224, %v267
      %v291 = vmul.f32 %v225, %v267
      %v292 = vmul.f32 %v226, %v267
      %v293 = vmul.f32 %v227, %v267
      %v294 = vmul.f32 %v228, %v267
      %v295 = vmul.f32 %v229, %v267
      %v296 = vmul.f32 %v230, %v267
      %v297 = vmul.f32 %v231, %v267
      %v298 = vmul.f32 %v232, %v267
      %v299 = vmul.f32 %v233, %v267
      %v300 = vmul.f32 %v234, %v267
      %v301 = vmul.f32 %v235, %v267
      %v302 = vmul.f32 %v236, %v267
      %v303 = vmul.f32 %v237, %v267
      %v304 = vmul.f32 %v238, %v267
      %v305 = vmul.f32 %v239, %v267
      %v306 = vmul.f32 %v240, %v267
      %v307 = vmul.f32 %v241, %v267
      %v308 = vmul.f32 %v242, %v267
      %v309 = vmul.f32 %v243, %v267
      %v310 = vmul.f32 %v244, %v267
      %v311 = vmul.f32 %v245, %v267
      %v312 = vmul.f32 %v246, %v267
      %v313 = vmul.f32 %v247, %v267
      %v314 = vmul.f32 %v248, %v267
      %v315 = vmul.f32 %v249, %v267
      %v316 = vmul.f32 %v250, %v267
      %v317 = vmul.f32 %v251, %v267
      %v318 = vmul.f32 %v252, %v267
      %v319 = vmul.f32 %v253, %v267
      %v320 = vmul.f32 %v254, %v267
      %v321 = vmul.f32 %v255, %v267
      %v322 = vmul.f32 %v256, %v267
      %v323 = vmul.f32 %v257, %v267
      %v324 = vmul.f32 %v258, %v267
      %v325 = vmul.f32 %v259, %v267
      %v326 = vmul.f32 %v260, %v267
      %v327 = vmul.f32 %v261, %v267
      %v328 = vmul.f32 %v262, %v267
      %v329 = vmul.f32 %v263, %v267
      %v330 = vmul.f32 %v264, %v267
      %v331 = vmul.f32 %v265, %v267
      %v332 = vld [vmem:[%s3 + $0x1] sm:$0x1]
      %v333 = vperm.slane %v332, 0
      %v334 = vadd.f32 %v268, %v333
      %v335 = vadd.f32 %v269, %v333
      %v336 = vadd.f32 %v270, %v333
      %v337 = vadd.f32 %v271, %v333
      %v338 = vadd.f32 %v272, %v333
      %v339 = vadd.f32 %v273, %v333
      %v340 = vadd.f32 %v274, %v333
      %v341 = vadd.f32 %v275, %v333
      %v342 = vadd.f32 %v276, %v333
      %v343 = vadd.f32 %v277, %v333
      %v344 = vadd.f32 %v278, %v333
      %v345 = vadd.f32 %v279, %v333
      %v346 = vadd.f32 %v280, %v333
      %v347 = vadd.f32 %v281, %v333
      %v348 = vadd.f32 %v282, %v333
      %v349 = vadd.f32 %v283, %v333
      %v350 = vadd.f32 %v284, %v333
      %v351 = vadd.f32 %v285, %v333
      %v352 = vadd.f32 %v286, %v333
      %v353 = vadd.f32 %v287, %v333
      %v354 = vadd.f32 %v288, %v333
      %v355 = vadd.f32 %v289, %v333
      %v356 = vadd.f32 %v290, %v333
      %v357 = vadd.f32 %v291, %v333
      %v358 = vadd.f32 %v292, %v333
      %v359 = vadd.f32 %v293, %v333
      %v360 = vadd.f32 %v294, %v333
      %v361 = vadd.f32 %v295, %v333
      %v362 = vadd.f32 %v296, %v333
      %v363 = vadd.f32 %v297, %v333
      %v364 = vadd.f32 %v298, %v333
      %v365 = vadd.f32 %v299, %v333
      %v366 = vadd.f32 %v300, %v333
      %v367 = vadd.f32 %v301, %v333
      %v368 = vadd.f32 %v302, %v333
      %v369 = vadd.f32 %v303, %v333
      %v370 = vadd.f32 %v304, %v333
      %v371 = vadd.f32 %v305, %v333
      %v372 = vadd.f32 %v306, %v333
      %v373 = vadd.f32 %v307, %v333
      %v374 = vadd.f32 %v308, %v333
      %v375 = vadd.f32 %v309, %v333
      %v376 = vadd.f32 %v310, %v333
      %v377 = vadd.f32 %v311, %v333
      %v378 = vadd.f32 %v312, %v333
      %v379 = vadd.f32 %v313, %v333
      %v380 = vadd.f32 %v314, %v333
      %v381 = vadd.f32 %v315, %v333
      %v382 = vadd.f32 %v316, %v333
      %v383 = vadd.f32 %v317, %v333
      %v384 = vadd.f32 %v318, %v333
      %v385 = vadd.f32 %v319, %v333
      %v386 = vadd.f32 %v320, %v333
      %v387 = vadd.f32 %v321, %v333
      %v388 = vadd.f32 %v322, %v333
      %v389 = vadd.f32 %v323, %v333
      %v390 = vadd.f32 %v324, %v333
      %v391 = vadd.f32 %v325, %v333
      %v392 = vadd.f32 %v326, %v333
      %v393 = vadd.f32 %v327, %v333
      %v394 = vadd.f32 %v328, %v333
      %v395 = vadd.f32 %v329, %v333
      %v396 = vadd.f32 %v330, %v333
      %v397 = vadd.f32 %v331, %v333
      %v398 = vmax.f32 %v334, 0.0
      %v399 = vmax.f32 %v335, 0.0
      %v400 = vmax.f32 %v336, 0.0
      %v401 = vmax.f32 %v337, 0.0
      %v402 = vmax.f32 %v338, 0.0
      %v403 = vmax.f32 %v339, 0.0
      %v404 = vmax.f32 %v340, 0.0
      %v405 = vmax.f32 %v341, 0.0
      %v406 = vmax.f32 %v342, 0.0
      %v407 = vmax.f32 %v343, 0.0
      %v408 = vmax.f32 %v344, 0.0
      %v409 = vmax.f32 %v345, 0.0
      %v410 = vmax.f32 %v346, 0.0
      %v411 = vmax.f32 %v347, 0.0
      %v412 = vmax.f32 %v348, 0.0
      %v413 = vmax.f32 %v349, 0.0
      %v414 = vmax.f32 %v350, 0.0
      %v415 = vmax.f32 %v351, 0.0
      %v416 = vmax.f32 %v352, 0.0
      %v417 = vmax.f32 %v353, 0.0
      %v418 = vmax.f32 %v354, 0.0
      %v419 = vmax.f32 %v355, 0.0
      %v420 = vmax.f32 %v356, 0.0
      %v421 = vmax.f32 %v357, 0.0
      %v422 = vmax.f32 %v358, 0.0
      %v423 = vmax.f32 %v359, 0.0
      %v424 = vmax.f32 %v360, 0.0
      %v425 = vmax.f32 %v361, 0.0
      %v426 = vmax.f32 %v362, 0.0
      %v427 = vmax.f32 %v363, 0.0
      %v428 = vmax.f32 %v364, 0.0
      %v429 = vmax.f32 %v365, 0.0
      %v430 = vmax.f32 %v366, 0.0
      %v431 = vmax.f32 %v367, 0.0
      %v432 = vmax.f32 %v368, 0.0
      %v433 = vmax.f32 %v369, 0.0
      %v434 = vmax.f32 %v370, 0.0
      %v435 = vmax.f32 %v371, 0.0
      %v436 = vmax.f32 %v372, 0.0
      %v437 = vmax.f32 %v373, 0.0
      %v438 = vmax.f32 %v374, 0.0
      %v439 = vmax.f32 %v375, 0.0
      %v440 = vmax.f32 %v376, 0.0
      %v441 = vmax.f32 %v377, 0.0
      %v442 = vmax.f32 %v378, 0.0
      %v443 = vmax.f32 %v379, 0.0
      %v444 = vmax.f32 %v380, 0.0
      %v445 = vmax.f32 %v381, 0.0
      %v446 = vmax.f32 %v382, 0.0
      %v447 = vmax.f32 %v383, 0.0
      %v448 = vmax.f32 %v384, 0.0
      %v449 = vmax.f32 %v385, 0.0
      %v450 = vmax.f32 %v386, 0.0
      %v451 = vmax.f32 %v387, 0.0
      %v452 = vmax.f32 %v388, 0.0
      %v453 = vmax.f32 %v389, 0.0
      %v454 = vmax.f32 %v390, 0.0
      %v455 = vmax.f32 %v391, 0.0
      %v456 = vmax.f32 %v392, 0.0
      %v457 = vmax.f32 %v393, 0.0
      %v458 = vmax.f32 %v394, 0.0
      %v459 = vmax.f32 %v395, 0.0
      %v460 = vmax.f32 %v396, 0.0
      %v461 = vmax.f32 %v397, 0.0
      %v462 = vld [vmem:[%s1] sm:$0xf]
      %v463 = vld [vmem:[%s1 + $0x4] sm:$0xf]
      %v464 = vld [vmem:[%s1 + $0x8] sm:$0xf]
      %v465 = vld [vmem:[%s1 + $0xc] sm:$0xf]
      %v466 = vld [vmem:[%s2] sm:$0x1]
      %v467 = vpack.c.bf16 %v399, %v398
      %v468 = vpack.c.bf16 %v401, %v400
      %v469 = vpack.c.bf16 %v403, %v402
      %v470 = vpack.c.bf16 %v405, %v404
      %v471 = vpack.c.bf16 %v407, %v406
      %v472 = vpack.c.bf16 %v409, %v408
      %v473 = vpack.c.bf16 %v411, %v410
      %v474 = vpack.c.bf16 %v413, %v412
      %v475 = vpack.c.bf16 %v415, %v414
      %v476 = vpack.c.bf16 %v417, %v416
      %v477 = vpack.c.bf16 %v419, %v418
      %v478 = vpack.c.bf16 %v421, %v420
      %v479 = vpack.c.bf16 %v423, %v422
      %v480 = vpack.c.bf16 %v425, %v424
      %v481 = vpack.c.bf16 %v427, %v426
      %v482 = vpack.c.bf16 %v429, %v428
      %v483 = vpack.c.bf16 %v431, %v430
      %v484 = vpack.c.bf16 %v433, %v432
      %v485 = vpack.c.bf16 %v435, %v434
      %v486 = vpack.c.bf16 %v437, %v436
      %v487 = vpack.c.bf16 %v439, %v438
      %v488 = vpack.c.bf16 %v441, %v440
      %v489 = vpack.c.bf16 %v443, %v442
      %v490 = vpack.c.bf16 %v445, %v444
      %v491 = vpack.c.bf16 %v447, %v446
      %v492 = vpack.c.bf16 %v449, %v448
      %v493 = vpack.c.bf16 %v451, %v450
      %v494 = vpack.c.bf16 %v453, %v452
      %v495 = vpack.c.bf16 %v455, %v454
      %v496 = vpack.c.bf16 %v457, %v456
      %v497 = vpack.c.bf16 %v459, %v458
      %v498 = vpack.c.bf16 %v461, %v460
      %v499 = vperm.slane %v466, 0
      %v504 = vunpack.c.l.b16 %v462
      %v505 = vunpack.c.l.b16 %v463
      %v506 = vunpack.c.l.b16 %v464
      %v507 = vunpack.c.l.b16 %v465
      %v508 = vpack.c.b16 %v505, %v504
      %v509 = vpack.c.b16 %v507, %v506
      %vm512 = vcmask 261120
      %v514 = vsel %vm512, %v467, 0
      %v517 = vsel %vm512, %v468, 0
      %v520 = vsel %vm512, %v469, 0
      %v523 = vsel %vm512, %v470, 0
      %v526 = vsel %vm512, %v471, 0
      %v529 = vsel %vm512, %v472, 0
      %v532 = vsel %vm512, %v473, 0
      %v535 = vsel %vm512, %v474, 0
      %v538 = vsel %vm512, %v475, 0
      %v541 = vsel %vm512, %v476, 0
      %v544 = vsel %vm512, %v477, 0
      %v547 = vsel %vm512, %v478, 0
      %v550 = vsel %vm512, %v479, 0
      %v553 = vsel %vm512, %v480, 0
      %v556 = vsel %vm512, %v481, 0
      %v559 = vsel %vm512, %v482, 0
      %v562 = vsel %vm512, %v483, 0
      %v565 = vsel %vm512, %v484, 0
      %v568 = vsel %vm512, %v485, 0
      %v571 = vsel %vm512, %v486, 0
      %v574 = vsel %vm512, %v487, 0
      %v577 = vsel %vm512, %v488, 0
      %v580 = vsel %vm512, %v489, 0
      %v583 = vsel %vm512, %v490, 0
      %v586 = vsel %vm512, %v491, 0
      %v589 = vsel %vm512, %v492, 0
      %v592 = vsel %vm512, %v493, 0
      %v595 = vsel %vm512, %v494, 0
      %v598 = vsel %vm512, %v495, 0
      %v601 = vsel %vm512, %v496, 0
      %v604 = vsel %vm512, %v497, 0
      %v607 = vsel %vm512, %v498, 0
      %609 = vmatpush.bf16.msra.mxu0 0
      %610 = vmatpush.bf16.msra.mxu0 0
      %611 = vmatpush.bf16.msra.mxu0 0
      %612 = vmatpush.bf16.msra.mxu0 0
      %613 = vmatpush.bf16.msra.mxu0 0
      %614 = vmatpush.bf16.msra.mxu0 0
      %615 = vmatpush.bf16.msra.mxu0 %v509
      %616 = vmatpush.bf16.msra.mxu0 %v508
      %617 = vmatmul.bf16.gmra.mxu0 %v514
      %v618 = vpop.f32.mrf.mxu0
      %v619 = vadd.f32 %v499, %v618
      %v620 = vpop.f32.mrf.mxu0
      %v621 = vadd.f32 %v499, %v620
      %622 = vmatmul.bf16.gmra.mxu0 %v517
      %v623 = vpop.f32.mrf.mxu0
      %v624 = vadd.f32 %v499, %v623
      %v625 = vpop.f32.mrf.mxu0
      %v626 = vadd.f32 %v499, %v625
      %627 = vmatmul.bf16.gmra.mxu0 %v520
      %v628 = vpop.f32.mrf.mxu0
      %v629 = vadd.f32 %v499, %v628
      %v630 = vpop.f32.mrf.mxu0
      %v631 = vadd.f32 %v499, %v630
      %632 = vmatmul.bf16.gmra.mxu0 %v523
      %v633 = vpop.f32.mrf.mxu0
      %v634 = vadd.f32 %v499, %v633
      %v635 = vpop.f32.mrf.mxu0
      %v636 = vadd.f32 %v499, %v635
      %637 = vmatmul.bf16.gmra.mxu0 %v526
      %v638 = vpop.f32.mrf.mxu0
      %v639 = vadd.f32 %v499, %v638
      %v640 = vpop.f32.mrf.mxu0
      %v641 = vadd.f32 %v499, %v640
      %642 = vmatmul.bf16.gmra.mxu0 %v529
      %v643 = vpop.f32.mrf.mxu0
      %v644 = vadd.f32 %v499, %v643
      %v645 = vpop.f32.mrf.mxu0
      %v646 = vadd.f32 %v499, %v645
      %647 = vmatmul.bf16.gmra.mxu0 %v532
      %v648 = vpop.f32.mrf.mxu0
      %v649 = vadd.f32 %v499, %v648
      %v650 = vpop.f32.mrf.mxu0
      %v651 = vadd.f32 %v499, %v650
      %652 = vmatmul.bf16.gmra.mxu0 %v535
      %v653 = vpop.f32.mrf.mxu0
      %v654 = vadd.f32 %v499, %v653
      %v655 = vpop.f32.mrf.mxu0
      %v656 = vadd.f32 %v499, %v655
      %657 = vmatmul.bf16.gmra.mxu0 %v538
      %v658 = vpop.f32.mrf.mxu0
      %v659 = vadd.f32 %v499, %v658
      %v660 = vpop.f32.mrf.mxu0
      %v661 = vadd.f32 %v499, %v660
      %662 = vmatmul.bf16.gmra.mxu0 %v541
      %v663 = vpop.f32.mrf.mxu0
      %v664 = vadd.f32 %v499, %v663
      %v665 = vpop.f32.mrf.mxu0
      %v666 = vadd.f32 %v499, %v665
      %667 = vmatmul.bf16.gmra.mxu0 %v544
      %v668 = vpop.f32.mrf.mxu0
      %v669 = vadd.f32 %v499, %v668
      %v670 = vpop.f32.mrf.mxu0
      %v671 = vadd.f32 %v499, %v670
      %672 = vmatmul.bf16.gmra.mxu0 %v547
      %v673 = vpop.f32.mrf.mxu0
      %v674 = vadd.f32 %v499, %v673
      %v675 = vpop.f32.mrf.mxu0
      %v676 = vadd.f32 %v499, %v675
      %677 = vmatmul.bf16.gmra.mxu0 %v550
      %v678 = vpop.f32.mrf.mxu0
      %v679 = vadd.f32 %v499, %v678
      %v680 = vpop.f32.mrf.mxu0
      %v681 = vadd.f32 %v499, %v680
      %682 = vmatmul.bf16.gmra.mxu0 %v553
      %v683 = vpop.f32.mrf.mxu0
      %v684 = vadd.f32 %v499, %v683
      %v685 = vpop.f32.mrf.mxu0
      %v686 = vadd.f32 %v499, %v685
      %687 = vmatmul.bf16.gmra.mxu0 %v556
      %v688 = vpop.f32.mrf.mxu0
      %v689 = vadd.f32 %v499, %v688
      %v690 = vpop.f32.mrf.mxu0
      %v691 = vadd.f32 %v499, %v690
      %692 = vmatmul.bf16.gmra.mxu0 %v559
      %v693 = vpop.f32.mrf.mxu0
      %v694 = vadd.f32 %v499, %v693
      %v695 = vpop.f32.mrf.mxu0
      %v696 = vadd.f32 %v499, %v695
      %697 = vmatmul.bf16.gmra.mxu0 %v562
      %v698 = vpop.f32.mrf.mxu0
      %v699 = vadd.f32 %v499, %v698
      %v700 = vpop.f32.mrf.mxu0
      %v701 = vadd.f32 %v499, %v700
      %702 = vmatmul.bf16.gmra.mxu0 %v565
      %v703 = vpop.f32.mrf.mxu0
      %v704 = vadd.f32 %v499, %v703
      %v705 = vpop.f32.mrf.mxu0
      %v706 = vadd.f32 %v499, %v705
      %707 = vmatmul.bf16.gmra.mxu0 %v568
      %v708 = vpop.f32.mrf.mxu0
      %v709 = vadd.f32 %v499, %v708
      %v710 = vpop.f32.mrf.mxu0
      %v711 = vadd.f32 %v499, %v710
      %712 = vmatmul.bf16.gmra.mxu0 %v571
      %v713 = vpop.f32.mrf.mxu0
      %v714 = vadd.f32 %v499, %v713
      %v715 = vpop.f32.mrf.mxu0
      %v716 = vadd.f32 %v499, %v715
      %717 = vmatmul.bf16.gmra.mxu0 %v574
      %v718 = vpop.f32.mrf.mxu0
      %v719 = vadd.f32 %v499, %v718
      %v720 = vpop.f32.mrf.mxu0
      %v721 = vadd.f32 %v499, %v720
      %722 = vmatmul.bf16.gmra.mxu0 %v577
      %v723 = vpop.f32.mrf.mxu0
      %v724 = vadd.f32 %v499, %v723
      %v725 = vpop.f32.mrf.mxu0
      %v726 = vadd.f32 %v499, %v725
      %727 = vmatmul.bf16.gmra.mxu0 %v580
      %v728 = vpop.f32.mrf.mxu0
      %v729 = vadd.f32 %v499, %v728
      %v730 = vpop.f32.mrf.mxu0
      %v731 = vadd.f32 %v499, %v730
      %732 = vmatmul.bf16.gmra.mxu0 %v583
      %v733 = vpop.f32.mrf.mxu0
      %v734 = vadd.f32 %v499, %v733
      %v735 = vpop.f32.mrf.mxu0
      %v736 = vadd.f32 %v499, %v735
      %737 = vmatmul.bf16.gmra.mxu0 %v586
      %v738 = vpop.f32.mrf.mxu0
      %v739 = vadd.f32 %v499, %v738
      %v740 = vpop.f32.mrf.mxu0
      %v741 = vadd.f32 %v499, %v740
      %742 = vmatmul.bf16.gmra.mxu0 %v589
      %v743 = vpop.f32.mrf.mxu0
      %v744 = vadd.f32 %v499, %v743
      %v745 = vpop.f32.mrf.mxu0
      %v746 = vadd.f32 %v499, %v745
      %747 = vmatmul.bf16.gmra.mxu0 %v592
      %v748 = vpop.f32.mrf.mxu0
      %v749 = vadd.f32 %v499, %v748
      %v750 = vpop.f32.mrf.mxu0
      %v751 = vadd.f32 %v499, %v750
      %752 = vmatmul.bf16.gmra.mxu0 %v595
      %v753 = vpop.f32.mrf.mxu0
      %v754 = vadd.f32 %v499, %v753
      %v755 = vpop.f32.mrf.mxu0
      %v756 = vadd.f32 %v499, %v755
      %757 = vmatmul.bf16.gmra.mxu0 %v598
      %v758 = vpop.f32.mrf.mxu0
      %v759 = vadd.f32 %v499, %v758
      %v760 = vpop.f32.mrf.mxu0
      %v761 = vadd.f32 %v499, %v760
      %762 = vmatmul.bf16.gmra.mxu0 %v601
      %v763 = vpop.f32.mrf.mxu0
      %v764 = vadd.f32 %v499, %v763
      %v765 = vpop.f32.mrf.mxu0
      %v766 = vadd.f32 %v499, %v765
      %767 = vmatmul.bf16.gmra.mxu0 %v604
      %v768 = vpop.f32.mrf.mxu0
      %v769 = vadd.f32 %v499, %v768
      %v770 = vpop.f32.mrf.mxu0
      %v771 = vadd.f32 %v499, %v770
      %772 = vmatmul.bf16.gmra.mxu0 %v607
      %v773 = vpop.f32.mrf.mxu0
      %v774 = vadd.f32 %v499, %v773
      %v775 = vpop.f32.mrf.mxu0
      %v776 = vadd.f32 %v499, %v775
      %777 = vdwg.mxu0
      %v778 = vmax.f32 %v619, 0.0
      %v779 = vmax.f32 %v621, 0.0
      %v780 = vmax.f32 %v624, 0.0
      %v781 = vmax.f32 %v626, 0.0
      %v782 = vmax.f32 %v629, 0.0
      %v783 = vmax.f32 %v631, 0.0
      %v784 = vmax.f32 %v634, 0.0
      %v785 = vmax.f32 %v636, 0.0
      %v786 = vmax.f32 %v639, 0.0
      %v787 = vmax.f32 %v641, 0.0
      %v788 = vmax.f32 %v644, 0.0
      %v789 = vmax.f32 %v646, 0.0
      %v790 = vmax.f32 %v649, 0.0
      %v791 = vmax.f32 %v651, 0.0
      %v792 = vmax.f32 %v654, 0.0
      %v793 = vmax.f32 %v656, 0.0
      %v794 = vmax.f32 %v659, 0.0
      %v795 = vmax.f32 %v661, 0.0
      %v796 = vmax.f32 %v664, 0.0
      %v797 = vmax.f32 %v666, 0.0
      %v798 = vmax.f32 %v669, 0.0
      %v799 = vmax.f32 %v671, 0.0
      %v800 = vmax.f32 %v674, 0.0
      %v801 = vmax.f32 %v676, 0.0
      %v802 = vmax.f32 %v679, 0.0
      %v803 = vmax.f32 %v681, 0.0
      %v804 = vmax.f32 %v684, 0.0
      %v805 = vmax.f32 %v686, 0.0
      %v806 = vmax.f32 %v689, 0.0
      %v807 = vmax.f32 %v691, 0.0
      %v808 = vmax.f32 %v694, 0.0
      %v809 = vmax.f32 %v696, 0.0
      %v810 = vmax.f32 %v699, 0.0
      %v811 = vmax.f32 %v701, 0.0
      %v812 = vmax.f32 %v704, 0.0
      %v813 = vmax.f32 %v706, 0.0
      %v814 = vmax.f32 %v709, 0.0
      %v815 = vmax.f32 %v711, 0.0
      %v816 = vmax.f32 %v714, 0.0
      %v817 = vmax.f32 %v716, 0.0
      %v818 = vmax.f32 %v719, 0.0
      %v819 = vmax.f32 %v721, 0.0
      %v820 = vmax.f32 %v724, 0.0
      %v821 = vmax.f32 %v726, 0.0
      %v822 = vmax.f32 %v729, 0.0
      %v823 = vmax.f32 %v731, 0.0
      %v824 = vmax.f32 %v734, 0.0
      %v825 = vmax.f32 %v736, 0.0
      %v826 = vmax.f32 %v739, 0.0
      %v827 = vmax.f32 %v741, 0.0
      %v828 = vmax.f32 %v744, 0.0
      %v829 = vmax.f32 %v746, 0.0
      %v830 = vmax.f32 %v749, 0.0
      %v831 = vmax.f32 %v751, 0.0
      %v832 = vmax.f32 %v754, 0.0
      %v833 = vmax.f32 %v756, 0.0
      %v834 = vmax.f32 %v759, 0.0
      %v835 = vmax.f32 %v761, 0.0
      %v836 = vmax.f32 %v764, 0.0
      %v837 = vmax.f32 %v766, 0.0
      %v838 = vmax.f32 %v769, 0.0
      %v839 = vmax.f32 %v771, 0.0
      %v840 = vmax.f32 %v774, 0.0
      %v841 = vmax.f32 %v776, 0.0
      %v842 = vld [vmem:[%s1 + $0x40] sm:$0xf]
      %v843 = vld [vmem:[%s1 + $0x44] sm:$0xf]
      %v844 = vld [vmem:[%s1 + $0x48] sm:$0xf]
      %v845 = vld [vmem:[%s1 + $0x4c] sm:$0xf]
      %v846 = vld [vmem:[%s1 + $0x50] sm:$0xf]
      %v847 = vld [vmem:[%s1 + $0x54] sm:$0xf]
      %v848 = vld [vmem:[%s1 + $0x58] sm:$0xf]
      %v849 = vld [vmem:[%s1 + $0x5c] sm:$0xf]
      %v850 = vld [vmem:[%s1 + $0x60] sm:$0xf]
      %v851 = vld [vmem:[%s1 + $0x64] sm:$0xf]
      %v852 = vld [vmem:[%s1 + $0x68] sm:$0xf]
      %v853 = vld [vmem:[%s1 + $0x6c] sm:$0xf]
      %v854 = vld [vmem:[%s1 + $0x70] sm:$0xf]
      %v855 = vld [vmem:[%s1 + $0x74] sm:$0xf]
      %v856 = vld [vmem:[%s1 + $0x78] sm:$0xf]
      %v857 = vld [vmem:[%s1 + $0x7c] sm:$0xf]
      %v858 = vld [vmem:[%s2 + $0x1] sm:$0x1]
      %v859 = vpack.c.bf16 %v779, %v778
      %v860 = vpack.c.bf16 %v781, %v780
      %v861 = vpack.c.bf16 %v783, %v782
      %v862 = vpack.c.bf16 %v785, %v784
      %v863 = vpack.c.bf16 %v787, %v786
      %v864 = vpack.c.bf16 %v789, %v788
      %v865 = vpack.c.bf16 %v791, %v790
      %v866 = vpack.c.bf16 %v793, %v792
      %v867 = vpack.c.bf16 %v795, %v794
      %v868 = vpack.c.bf16 %v797, %v796
      %v869 = vpack.c.bf16 %v799, %v798
      %v870 = vpack.c.bf16 %v801, %v800
      %v871 = vpack.c.bf16 %v803, %v802
      %v872 = vpack.c.bf16 %v805, %v804
      %v873 = vpack.c.bf16 %v807, %v806
      %v874 = vpack.c.bf16 %v809, %v808
      %v875 = vpack.c.bf16 %v811, %v810
      %v876 = vpack.c.bf16 %v813, %v812
      %v877 = vpack.c.bf16 %v815, %v814
      %v878 = vpack.c.bf16 %v817, %v816
      %v879 = vpack.c.bf16 %v819, %v818
      %v880 = vpack.c.bf16 %v821, %v820
      %v881 = vpack.c.bf16 %v823, %v822
      %v882 = vpack.c.bf16 %v825, %v824
      %v883 = vpack.c.bf16 %v827, %v826
      %v884 = vpack.c.bf16 %v829, %v828
      %v885 = vpack.c.bf16 %v831, %v830
      %v886 = vpack.c.bf16 %v833, %v832
      %v887 = vpack.c.bf16 %v835, %v834
      %v888 = vpack.c.bf16 %v837, %v836
      %v889 = vpack.c.bf16 %v839, %v838
      %v890 = vpack.c.bf16 %v841, %v840
      %v891 = vperm.slane %v858, 0
      %v908 = vunpack.c.l.b16 %v842
      %v909 = vunpack.c.l.b16 %v843
      %v910 = vunpack.c.l.b16 %v844
      %v911 = vunpack.c.l.b16 %v845
      %v912 = vunpack.c.l.b16 %v846
      %v913 = vunpack.c.l.b16 %v847
      %v914 = vunpack.c.l.b16 %v848
      %v915 = vunpack.c.l.b16 %v849
      %v916 = vunpack.c.l.b16 %v850
      %v917 = vunpack.c.l.b16 %v851
      %v918 = vunpack.c.l.b16 %v852
      %v919 = vunpack.c.l.b16 %v853
      %v920 = vunpack.c.l.b16 %v854
      %v921 = vunpack.c.l.b16 %v855
      %v922 = vunpack.c.l.b16 %v856
      %v923 = vunpack.c.l.b16 %v857
      %v924 = vpack.c.b16 %v909, %v908
      %v925 = vpack.c.b16 %v911, %v910
      %v926 = vpack.c.b16 %v913, %v912
      %v927 = vpack.c.b16 %v915, %v914
      %v928 = vpack.c.b16 %v917, %v916
      %v929 = vpack.c.b16 %v919, %v918
      %v930 = vpack.c.b16 %v921, %v920
      %v931 = vpack.c.b16 %v923, %v922
      %940 = vmatpush.bf16.msra.mxu0 %v931
      %941 = vmatpush.bf16.msra.mxu0 %v930
      %942 = vmatpush.bf16.msra.mxu0 %v929
      %943 = vmatpush.bf16.msra.mxu0 %v928
      %944 = vmatpush.bf16.msra.mxu0 %v927
      %945 = vmatpush.bf16.msra.mxu0 %v926
      %946 = vmatpush.bf16.msra.mxu0 %v925
      %947 = vmatpush.bf16.msra.mxu0 %v924
      %948 = vmatmul.bf16.gmra.mxu0 %v859
      %v949 = vpop.f32.mrf.mxu0
      %v950 = vadd.f32 %v891, %v949
      %v951 = vpop.f32.mrf.mxu0
      %v952 = vadd.f32 %v891, %v951
      %953 = vmatmul.bf16.gmra.mxu0 %v860
      %v954 = vpop.f32.mrf.mxu0
      %v955 = vadd.f32 %v891, %v954
      %v956 = vpop.f32.mrf.mxu0
      %v957 = vadd.f32 %v891, %v956
      %958 = vmatmul.bf16.gmra.mxu0 %v861
      %v959 = vpop.f32.mrf.mxu0
      %v960 = vadd.f32 %v891, %v959
      %v961 = vpop.f32.mrf.mxu0
      %v962 = vadd.f32 %v891, %v961
      %963 = vmatmul.bf16.gmra.mxu0 %v862
      %v964 = vpop.f32.mrf.mxu0
      %v965 = vadd.f32 %v891, %v964
      %v966 = vpop.f32.mrf.mxu0
      %v967 = vadd.f32 %v891, %v966
      %968 = vmatmul.bf16.gmra.mxu0 %v863
      %v969 = vpop.f32.mrf.mxu0
      %v970 = vadd.f32 %v891, %v969
      %v971 = vpop.f32.mrf.mxu0
      %v972 = vadd.f32 %v891, %v971
      %973 = vmatmul.bf16.gmra.mxu0 %v864
      %v974 = vpop.f32.mrf.mxu0
      %v975 = vadd.f32 %v891, %v974
      %v976 = vpop.f32.mrf.mxu0
      %v977 = vadd.f32 %v891, %v976
      %978 = vmatmul.bf16.gmra.mxu0 %v865
      %v979 = vpop.f32.mrf.mxu0
      %v980 = vadd.f32 %v891, %v979
      %v981 = vpop.f32.mrf.mxu0
      %v982 = vadd.f32 %v891, %v981
      %983 = vmatmul.bf16.gmra.mxu0 %v866
      %v984 = vpop.f32.mrf.mxu0
      %v985 = vadd.f32 %v891, %v984
      %v986 = vpop.f32.mrf.mxu0
      %v987 = vadd.f32 %v891, %v986
      %988 = vmatmul.bf16.gmra.mxu0 %v867
      %v989 = vpop.f32.mrf.mxu0
      %v990 = vadd.f32 %v891, %v989
      %v991 = vpop.f32.mrf.mxu0
      %v992 = vadd.f32 %v891, %v991
      %993 = vmatmul.bf16.gmra.mxu0 %v868
      %v994 = vpop.f32.mrf.mxu0
      %v995 = vadd.f32 %v891, %v994
      %v996 = vpop.f32.mrf.mxu0
      %v997 = vadd.f32 %v891, %v996
      %998 = vmatmul.bf16.gmra.mxu0 %v869
      %v999 = vpop.f32.mrf.mxu0
      %v1000 = vadd.f32 %v891, %v999
      %v1001 = vpop.f32.mrf.mxu0
      %v1002 = vadd.f32 %v891, %v1001
      %1003 = vmatmul.bf16.gmra.mxu0 %v870
      %v1004 = vpop.f32.mrf.mxu0
      %v1005 = vadd.f32 %v891, %v1004
      %v1006 = vpop.f32.mrf.mxu0
      %v1007 = vadd.f32 %v891, %v1006
      %1008 = vmatmul.bf16.gmra.mxu0 %v871
      %v1009 = vpop.f32.mrf.mxu0
      %v1010 = vadd.f32 %v891, %v1009
      %v1011 = vpop.f32.mrf.mxu0
      %v1012 = vadd.f32 %v891, %v1011
      %1013 = vmatmul.bf16.gmra.mxu0 %v872
      %v1014 = vpop.f32.mrf.mxu0
      %v1015 = vadd.f32 %v891, %v1014
      %v1016 = vpop.f32.mrf.mxu0
      %v1017 = vadd.f32 %v891, %v1016
      %1018 = vmatmul.bf16.gmra.mxu0 %v873
      %v1019 = vpop.f32.mrf.mxu0
      %v1020 = vadd.f32 %v891, %v1019
      %v1021 = vpop.f32.mrf.mxu0
      %v1022 = vadd.f32 %v891, %v1021
      %1023 = vmatmul.bf16.gmra.mxu0 %v874
      %v1024 = vpop.f32.mrf.mxu0
      %v1025 = vadd.f32 %v891, %v1024
      %v1026 = vpop.f32.mrf.mxu0
      %v1027 = vadd.f32 %v891, %v1026
      %1028 = vmatmul.bf16.gmra.mxu0 %v875
      %v1029 = vpop.f32.mrf.mxu0
      %v1030 = vadd.f32 %v891, %v1029
      %v1031 = vpop.f32.mrf.mxu0
      %v1032 = vadd.f32 %v891, %v1031
      %1033 = vmatmul.bf16.gmra.mxu0 %v876
      %v1034 = vpop.f32.mrf.mxu0
      %v1035 = vadd.f32 %v891, %v1034
      %v1036 = vpop.f32.mrf.mxu0
      %v1037 = vadd.f32 %v891, %v1036
      %1038 = vmatmul.bf16.gmra.mxu0 %v877
      %v1039 = vpop.f32.mrf.mxu0
      %v1040 = vadd.f32 %v891, %v1039
      %v1041 = vpop.f32.mrf.mxu0
      %v1042 = vadd.f32 %v891, %v1041
      %1043 = vmatmul.bf16.gmra.mxu0 %v878
      %v1044 = vpop.f32.mrf.mxu0
      %v1045 = vadd.f32 %v891, %v1044
      %v1046 = vpop.f32.mrf.mxu0
      %v1047 = vadd.f32 %v891, %v1046
      %1048 = vmatmul.bf16.gmra.mxu0 %v879
      %v1049 = vpop.f32.mrf.mxu0
      %v1050 = vadd.f32 %v891, %v1049
      %v1051 = vpop.f32.mrf.mxu0
      %v1052 = vadd.f32 %v891, %v1051
      %1053 = vmatmul.bf16.gmra.mxu0 %v880
      %v1054 = vpop.f32.mrf.mxu0
      %v1055 = vadd.f32 %v891, %v1054
      %v1056 = vpop.f32.mrf.mxu0
      %v1057 = vadd.f32 %v891, %v1056
      %1058 = vmatmul.bf16.gmra.mxu0 %v881
      %v1059 = vpop.f32.mrf.mxu0
      %v1060 = vadd.f32 %v891, %v1059
      %v1061 = vpop.f32.mrf.mxu0
      %v1062 = vadd.f32 %v891, %v1061
      %1063 = vmatmul.bf16.gmra.mxu0 %v882
      %v1064 = vpop.f32.mrf.mxu0
      %v1065 = vadd.f32 %v891, %v1064
      %v1066 = vpop.f32.mrf.mxu0
      %v1067 = vadd.f32 %v891, %v1066
      %1068 = vmatmul.bf16.gmra.mxu0 %v883
      %v1069 = vpop.f32.mrf.mxu0
      %v1070 = vadd.f32 %v891, %v1069
      %v1071 = vpop.f32.mrf.mxu0
      %v1072 = vadd.f32 %v891, %v1071
      %1073 = vmatmul.bf16.gmra.mxu0 %v884
      %v1074 = vpop.f32.mrf.mxu0
      %v1075 = vadd.f32 %v891, %v1074
      %v1076 = vpop.f32.mrf.mxu0
      %v1077 = vadd.f32 %v891, %v1076
      %1078 = vmatmul.bf16.gmra.mxu0 %v885
      %v1079 = vpop.f32.mrf.mxu0
      %v1080 = vadd.f32 %v891, %v1079
      %v1081 = vpop.f32.mrf.mxu0
      %v1082 = vadd.f32 %v891, %v1081
      %1083 = vmatmul.bf16.gmra.mxu0 %v886
      %v1084 = vpop.f32.mrf.mxu0
      %v1085 = vadd.f32 %v891, %v1084
      %v1086 = vpop.f32.mrf.mxu0
      %v1087 = vadd.f32 %v891, %v1086
      %1088 = vmatmul.bf16.gmra.mxu0 %v887
      %v1089 = vpop.f32.mrf.mxu0
      %v1090 = vadd.f32 %v891, %v1089
      %v1091 = vpop.f32.mrf.mxu0
      %v1092 = vadd.f32 %v891, %v1091
      %1093 = vmatmul.bf16.gmra.mxu0 %v888
      %v1094 = vpop.f32.mrf.mxu0
      %v1095 = vadd.f32 %v891, %v1094
      %v1096 = vpop.f32.mrf.mxu0
      %v1097 = vadd.f32 %v891, %v1096
      %1098 = vmatmul.bf16.gmra.mxu0 %v889
      %v1099 = vpop.f32.mrf.mxu0
      %v1100 = vadd.f32 %v891, %v1099
      %v1101 = vpop.f32.mrf.mxu0
      %v1102 = vadd.f32 %v891, %v1101
      %1103 = vmatmul.bf16.gmra.mxu0 %v890
      %v1104 = vpop.f32.mrf.mxu0
      %v1105 = vadd.f32 %v891, %v1104
      %v1106 = vpop.f32.mrf.mxu0
      %v1107 = vadd.f32 %v891, %v1106
      %1108 = vdwg.mxu0
      %v1109 = vmax.f32 %v950, 0.0
      %v1110 = vmax.f32 %v952, 0.0
      %v1111 = vmax.f32 %v955, 0.0
      %v1112 = vmax.f32 %v957, 0.0
      %v1113 = vmax.f32 %v960, 0.0
      %v1114 = vmax.f32 %v962, 0.0
      %v1115 = vmax.f32 %v965, 0.0
      %v1116 = vmax.f32 %v967, 0.0
      %v1117 = vmax.f32 %v970, 0.0
      %v1118 = vmax.f32 %v972, 0.0
      %v1119 = vmax.f32 %v975, 0.0
      %v1120 = vmax.f32 %v977, 0.0
      %v1121 = vmax.f32 %v980, 0.0
      %v1122 = vmax.f32 %v982, 0.0
      %v1123 = vmax.f32 %v985, 0.0
      %v1124 = vmax.f32 %v987, 0.0
      %v1125 = vmax.f32 %v990, 0.0
      %v1126 = vmax.f32 %v992, 0.0
      %v1127 = vmax.f32 %v995, 0.0
      %v1128 = vmax.f32 %v997, 0.0
      %v1129 = vmax.f32 %v1000, 0.0
      %v1130 = vmax.f32 %v1002, 0.0
      %v1131 = vmax.f32 %v1005, 0.0
      %v1132 = vmax.f32 %v1007, 0.0
      %v1133 = vmax.f32 %v1010, 0.0
      %v1134 = vmax.f32 %v1012, 0.0
      %v1135 = vmax.f32 %v1015, 0.0
      %v1136 = vmax.f32 %v1017, 0.0
      %v1137 = vmax.f32 %v1020, 0.0
      %v1138 = vmax.f32 %v1022, 0.0
      %v1139 = vmax.f32 %v1025, 0.0
      %v1140 = vmax.f32 %v1027, 0.0
      %v1141 = vmax.f32 %v1030, 0.0
      %v1142 = vmax.f32 %v1032, 0.0
      %v1143 = vmax.f32 %v1035, 0.0
      %v1144 = vmax.f32 %v1037, 0.0
      %v1145 = vmax.f32 %v1040, 0.0
      %v1146 = vmax.f32 %v1042, 0.0
      %v1147 = vmax.f32 %v1045, 0.0
      %v1148 = vmax.f32 %v1047, 0.0
      %v1149 = vmax.f32 %v1050, 0.0
      %v1150 = vmax.f32 %v1052, 0.0
      %v1151 = vmax.f32 %v1055, 0.0
      %v1152 = vmax.f32 %v1057, 0.0
      %v1153 = vmax.f32 %v1060, 0.0
      %v1154 = vmax.f32 %v1062, 0.0
      %v1155 = vmax.f32 %v1065, 0.0
      %v1156 = vmax.f32 %v1067, 0.0
      %v1157 = vmax.f32 %v1070, 0.0
      %v1158 = vmax.f32 %v1072, 0.0
      %v1159 = vmax.f32 %v1075, 0.0
      %v1160 = vmax.f32 %v1077, 0.0
      %v1161 = vmax.f32 %v1080, 0.0
      %v1162 = vmax.f32 %v1082, 0.0
      %v1163 = vmax.f32 %v1085, 0.0
      %v1164 = vmax.f32 %v1087, 0.0
      %v1165 = vmax.f32 %v1090, 0.0
      %v1166 = vmax.f32 %v1092, 0.0
      %v1167 = vmax.f32 %v1095, 0.0
      %v1168 = vmax.f32 %v1097, 0.0
      %v1169 = vmax.f32 %v1100, 0.0
      %v1170 = vmax.f32 %v1102, 0.0
      %v1171 = vmax.f32 %v1105, 0.0
      %v1172 = vmax.f32 %v1107, 0.0
      %v1173 = vld [vmem:[%s1 + $0x80] sm:$0xf]
      %v1174 = vld [vmem:[%s1 + $0x84] sm:$0xf]
      %v1175 = vld [vmem:[%s1 + $0x88] sm:$0xf]
      %v1176 = vld [vmem:[%s1 + $0x8c] sm:$0xf]
      %v1177 = vld [vmem:[%s1 + $0x90] sm:$0xf]
      %v1178 = vld [vmem:[%s1 + $0x94] sm:$0xf]
      %v1179 = vld [vmem:[%s1 + $0x98] sm:$0xf]
      %v1180 = vld [vmem:[%s1 + $0x9c] sm:$0xf]
      %v1181 = vld [vmem:[%s1 + $0xa0] sm:$0xf]
      %v1182 = vld [vmem:[%s1 + $0xa4] sm:$0xf]
      %v1183 = vld [vmem:[%s1 + $0xa8] sm:$0xf]
      %v1184 = vld [vmem:[%s1 + $0xac] sm:$0xf]
      %v1185 = vld [vmem:[%s1 + $0xb0] sm:$0xf]
      %v1186 = vld [vmem:[%s1 + $0xb4] sm:$0xf]
      %v1187 = vld [vmem:[%s1 + $0xb8] sm:$0xf]
      %v1188 = vld [vmem:[%s1 + $0xbc] sm:$0xf]
      %v1189 = vld [vmem:[%s2 + $0x2] sm:$0x1]
      %v1190 = vpack.c.bf16 %v1110, %v1109
      %v1191 = vpack.c.bf16 %v1112, %v1111
      %v1192 = vpack.c.bf16 %v1114, %v1113
      %v1193 = vpack.c.bf16 %v1116, %v1115
      %v1194 = vpack.c.bf16 %v1118, %v1117
      %v1195 = vpack.c.bf16 %v1120, %v1119
      %v1196 = vpack.c.bf16 %v1122, %v1121
      %v1197 = vpack.c.bf16 %v1124, %v1123
      %v1198 = vpack.c.bf16 %v1126, %v1125
      %v1199 = vpack.c.bf16 %v1128, %v1127
      %v1200 = vpack.c.bf16 %v1130, %v1129
      %v1201 = vpack.c.bf16 %v1132, %v1131
      %v1202 = vpack.c.bf16 %v1134, %v1133
      %v1203 = vpack.c.bf16 %v1136, %v1135
      %v1204 = vpack.c.bf16 %v1138, %v1137
      %v1205 = vpack.c.bf16 %v1140, %v1139
      %v1206 = vpack.c.bf16 %v1142, %v1141
      %v1207 = vpack.c.bf16 %v1144, %v1143
      %v1208 = vpack.c.bf16 %v1146, %v1145
      %v1209 = vpack.c.bf16 %v1148, %v1147
      %v1210 = vpack.c.bf16 %v1150, %v1149
      %v1211 = vpack.c.bf16 %v1152, %v1151
      %v1212 = vpack.c.bf16 %v1154, %v1153
      %v1213 = vpack.c.bf16 %v1156, %v1155
      %v1214 = vpack.c.bf16 %v1158, %v1157
      %v1215 = vpack.c.bf16 %v1160, %v1159
      %v1216 = vpack.c.bf16 %v1162, %v1161
      %v1217 = vpack.c.bf16 %v1164, %v1163
      %v1218 = vpack.c.bf16 %v1166, %v1165
      %v1219 = vpack.c.bf16 %v1168, %v1167
      %v1220 = vpack.c.bf16 %v1170, %v1169
      %v1221 = vpack.c.bf16 %v1172, %v1171
      %v1222 = vperm.slane %v1189, 0
      %v1239 = vunpack.c.l.b16 %v1173
      %v1240 = vunpack.c.l.b16 %v1174
      %v1241 = vunpack.c.l.b16 %v1175
      %v1242 = vunpack.c.l.b16 %v1176
      %v1243 = vunpack.c.l.b16 %v1177
      %v1244 = vunpack.c.l.b16 %v1178
      %v1245 = vunpack.c.l.b16 %v1179
      %v1246 = vunpack.c.l.b16 %v1180
      %v1247 = vunpack.c.l.b16 %v1181
      %v1248 = vunpack.c.l.b16 %v1182
      %v1249 = vunpack.c.l.b16 %v1183
      %v1250 = vunpack.c.l.b16 %v1184
      %v1251 = vunpack.c.l.b16 %v1185
      %v1252 = vunpack.c.l.b16 %v1186
      %v1253 = vunpack.c.l.b16 %v1187
      %v1254 = vunpack.c.l.b16 %v1188
      %v1255 = vpack.c.b16 %v1240, %v1239
      %v1256 = vpack.c.b16 %v1242, %v1241
      %v1257 = vpack.c.b16 %v1244, %v1243
      %v1258 = vpack.c.b16 %v1246, %v1245
      %v1259 = vpack.c.b16 %v1248, %v1247
      %v1260 = vpack.c.b16 %v1250, %v1249
      %v1261 = vpack.c.b16 %v1252, %v1251
      %v1262 = vpack.c.b16 %v1254, %v1253
      %1271 = vmatpush.bf16.msra.mxu0 %v1262
      %1272 = vmatpush.bf16.msra.mxu0 %v1261
      %1273 = vmatpush.bf16.msra.mxu0 %v1260
      %1274 = vmatpush.bf16.msra.mxu0 %v1259
      %1275 = vmatpush.bf16.msra.mxu0 %v1258
      %1276 = vmatpush.bf16.msra.mxu0 %v1257
      %1277 = vmatpush.bf16.msra.mxu0 %v1256
      %1278 = vmatpush.bf16.msra.mxu0 %v1255
      %1279 = vmatmul.bf16.gmra.mxu0 %v1190
      %v1280 = vpop.f32.mrf.mxu0
      %v1281 = vadd.f32 %v1222, %v1280
      %v1282 = vpop.f32.mrf.mxu0
      %v1283 = vadd.f32 %v1222, %v1282
      %1284 = vmatmul.bf16.gmra.mxu0 %v1191
      %v1285 = vpop.f32.mrf.mxu0
      %v1286 = vadd.f32 %v1222, %v1285
      %v1287 = vpop.f32.mrf.mxu0
      %v1288 = vadd.f32 %v1222, %v1287
      %1289 = vmatmul.bf16.gmra.mxu0 %v1192
      %v1290 = vpop.f32.mrf.mxu0
      %v1291 = vadd.f32 %v1222, %v1290
      %v1292 = vpop.f32.mrf.mxu0
      %v1293 = vadd.f32 %v1222, %v1292
      %1294 = vmatmul.bf16.gmra.mxu0 %v1193
      %v1295 = vpop.f32.mrf.mxu0
      %v1296 = vadd.f32 %v1222, %v1295
      %v1297 = vpop.f32.mrf.mxu0
      %v1298 = vadd.f32 %v1222, %v1297
      %1299 = vmatmul.bf16.gmra.mxu0 %v1194
      %v1300 = vpop.f32.mrf.mxu0
      %v1301 = vadd.f32 %v1222, %v1300
      %v1302 = vpop.f32.mrf.mxu0
      %v1303 = vadd.f32 %v1222, %v1302
      %1304 = vmatmul.bf16.gmra.mxu0 %v1195
      %v1305 = vpop.f32.mrf.mxu0
      %v1306 = vadd.f32 %v1222, %v1305
      %v1307 = vpop.f32.mrf.mxu0
      %v1308 = vadd.f32 %v1222, %v1307
      %1309 = vmatmul.bf16.gmra.mxu0 %v1196
      %v1310 = vpop.f32.mrf.mxu0
      %v1311 = vadd.f32 %v1222, %v1310
      %v1312 = vpop.f32.mrf.mxu0
      %v1313 = vadd.f32 %v1222, %v1312
      %1314 = vmatmul.bf16.gmra.mxu0 %v1197
      %v1315 = vpop.f32.mrf.mxu0
      %v1316 = vadd.f32 %v1222, %v1315
      %v1317 = vpop.f32.mrf.mxu0
      %v1318 = vadd.f32 %v1222, %v1317
      %1319 = vmatmul.bf16.gmra.mxu0 %v1198
      %v1320 = vpop.f32.mrf.mxu0
      %v1321 = vadd.f32 %v1222, %v1320
      %v1322 = vpop.f32.mrf.mxu0
      %v1323 = vadd.f32 %v1222, %v1322
      %1324 = vmatmul.bf16.gmra.mxu0 %v1199
      %v1325 = vpop.f32.mrf.mxu0
      %v1326 = vadd.f32 %v1222, %v1325
      %v1327 = vpop.f32.mrf.mxu0
      %v1328 = vadd.f32 %v1222, %v1327
      %1329 = vmatmul.bf16.gmra.mxu0 %v1200
      %v1330 = vpop.f32.mrf.mxu0
      %v1331 = vadd.f32 %v1222, %v1330
      %v1332 = vpop.f32.mrf.mxu0
      %v1333 = vadd.f32 %v1222, %v1332
      %1334 = vmatmul.bf16.gmra.mxu0 %v1201
      %v1335 = vpop.f32.mrf.mxu0
      %v1336 = vadd.f32 %v1222, %v1335
      %v1337 = vpop.f32.mrf.mxu0
      %v1338 = vadd.f32 %v1222, %v1337
      %1339 = vmatmul.bf16.gmra.mxu0 %v1202
      %v1340 = vpop.f32.mrf.mxu0
      %v1341 = vadd.f32 %v1222, %v1340
      %v1342 = vpop.f32.mrf.mxu0
      %v1343 = vadd.f32 %v1222, %v1342
      %1344 = vmatmul.bf16.gmra.mxu0 %v1203
      %v1345 = vpop.f32.mrf.mxu0
      %v1346 = vadd.f32 %v1222, %v1345
      %v1347 = vpop.f32.mrf.mxu0
      %v1348 = vadd.f32 %v1222, %v1347
      %1349 = vmatmul.bf16.gmra.mxu0 %v1204
      %v1350 = vpop.f32.mrf.mxu0
      %v1351 = vadd.f32 %v1222, %v1350
      %v1352 = vpop.f32.mrf.mxu0
      %v1353 = vadd.f32 %v1222, %v1352
      %1354 = vmatmul.bf16.gmra.mxu0 %v1205
      %v1355 = vpop.f32.mrf.mxu0
      %v1356 = vadd.f32 %v1222, %v1355
      %v1357 = vpop.f32.mrf.mxu0
      %v1358 = vadd.f32 %v1222, %v1357
      %1359 = vmatmul.bf16.gmra.mxu0 %v1206
      %v1360 = vpop.f32.mrf.mxu0
      %v1361 = vadd.f32 %v1222, %v1360
      %v1362 = vpop.f32.mrf.mxu0
      %v1363 = vadd.f32 %v1222, %v1362
      %1364 = vmatmul.bf16.gmra.mxu0 %v1207
      %v1365 = vpop.f32.mrf.mxu0
      %v1366 = vadd.f32 %v1222, %v1365
      %v1367 = vpop.f32.mrf.mxu0
      %v1368 = vadd.f32 %v1222, %v1367
      %1369 = vmatmul.bf16.gmra.mxu0 %v1208
      %v1370 = vpop.f32.mrf.mxu0
      %v1371 = vadd.f32 %v1222, %v1370
      %v1372 = vpop.f32.mrf.mxu0
      %v1373 = vadd.f32 %v1222, %v1372
      %1374 = vmatmul.bf16.gmra.mxu0 %v1209
      %v1375 = vpop.f32.mrf.mxu0
      %v1376 = vadd.f32 %v1222, %v1375
      %v1377 = vpop.f32.mrf.mxu0
      %v1378 = vadd.f32 %v1222, %v1377
      %1379 = vmatmul.bf16.gmra.mxu0 %v1210
      %v1380 = vpop.f32.mrf.mxu0
      %v1381 = vadd.f32 %v1222, %v1380
      %v1382 = vpop.f32.mrf.mxu0
      %v1383 = vadd.f32 %v1222, %v1382
      %1384 = vmatmul.bf16.gmra.mxu0 %v1211
      %v1385 = vpop.f32.mrf.mxu0
      %v1386 = vadd.f32 %v1222, %v1385
      %v1387 = vpop.f32.mrf.mxu0
      %v1388 = vadd.f32 %v1222, %v1387
      %1389 = vmatmul.bf16.gmra.mxu0 %v1212
      %v1390 = vpop.f32.mrf.mxu0
      %v1391 = vadd.f32 %v1222, %v1390
      %v1392 = vpop.f32.mrf.mxu0
      %v1393 = vadd.f32 %v1222, %v1392
      %1394 = vmatmul.bf16.gmra.mxu0 %v1213
      %v1395 = vpop.f32.mrf.mxu0
      %v1396 = vadd.f32 %v1222, %v1395
      %v1397 = vpop.f32.mrf.mxu0
      %v1398 = vadd.f32 %v1222, %v1397
      %1399 = vmatmul.bf16.gmra.mxu0 %v1214
      %v1400 = vpop.f32.mrf.mxu0
      %v1401 = vadd.f32 %v1222, %v1400
      %v1402 = vpop.f32.mrf.mxu0
      %v1403 = vadd.f32 %v1222, %v1402
      %1404 = vmatmul.bf16.gmra.mxu0 %v1215
      %v1405 = vpop.f32.mrf.mxu0
      %v1406 = vadd.f32 %v1222, %v1405
      %v1407 = vpop.f32.mrf.mxu0
      %v1408 = vadd.f32 %v1222, %v1407
      %1409 = vmatmul.bf16.gmra.mxu0 %v1216
      %v1410 = vpop.f32.mrf.mxu0
      %v1411 = vadd.f32 %v1222, %v1410
      %v1412 = vpop.f32.mrf.mxu0
      %v1413 = vadd.f32 %v1222, %v1412
      %1414 = vmatmul.bf16.gmra.mxu0 %v1217
      %v1415 = vpop.f32.mrf.mxu0
      %v1416 = vadd.f32 %v1222, %v1415
      %v1417 = vpop.f32.mrf.mxu0
      %v1418 = vadd.f32 %v1222, %v1417
      %1419 = vmatmul.bf16.gmra.mxu0 %v1218
      %v1420 = vpop.f32.mrf.mxu0
      %v1421 = vadd.f32 %v1222, %v1420
      %v1422 = vpop.f32.mrf.mxu0
      %v1423 = vadd.f32 %v1222, %v1422
      %1424 = vmatmul.bf16.gmra.mxu0 %v1219
      %v1425 = vpop.f32.mrf.mxu0
      %v1426 = vadd.f32 %v1222, %v1425
      %v1427 = vpop.f32.mrf.mxu0
      %v1428 = vadd.f32 %v1222, %v1427
      %1429 = vmatmul.bf16.gmra.mxu0 %v1220
      %v1430 = vpop.f32.mrf.mxu0
      %v1431 = vadd.f32 %v1222, %v1430
      %v1432 = vpop.f32.mrf.mxu0
      %v1433 = vadd.f32 %v1222, %v1432
      %1434 = vmatmul.bf16.gmra.mxu0 %v1221
      %v1435 = vpop.f32.mrf.mxu0
      %v1436 = vadd.f32 %v1222, %v1435
      %v1437 = vpop.f32.mrf.mxu0
      %v1438 = vadd.f32 %v1222, %v1437
      %1439 = vdwg.mxu0
      %v1440 = vmax.f32 %v1281, 0.0
      %v1441 = vmax.f32 %v1283, 0.0
      %v1442 = vmax.f32 %v1286, 0.0
      %v1443 = vmax.f32 %v1288, 0.0
      %v1444 = vmax.f32 %v1291, 0.0
      %v1445 = vmax.f32 %v1293, 0.0
      %v1446 = vmax.f32 %v1296, 0.0
      %v1447 = vmax.f32 %v1298, 0.0
      %v1448 = vmax.f32 %v1301, 0.0
      %v1449 = vmax.f32 %v1303, 0.0
      %v1450 = vmax.f32 %v1306, 0.0
      %v1451 = vmax.f32 %v1308, 0.0
      %v1452 = vmax.f32 %v1311, 0.0
      %v1453 = vmax.f32 %v1313, 0.0
      %v1454 = vmax.f32 %v1316, 0.0
      %v1455 = vmax.f32 %v1318, 0.0
      %v1456 = vmax.f32 %v1321, 0.0
      %v1457 = vmax.f32 %v1323, 0.0
      %v1458 = vmax.f32 %v1326, 0.0
      %v1459 = vmax.f32 %v1328, 0.0
      %v1460 = vmax.f32 %v1331, 0.0
      %v1461 = vmax.f32 %v1333, 0.0
      %v1462 = vmax.f32 %v1336, 0.0
      %v1463 = vmax.f32 %v1338, 0.0
      %v1464 = vmax.f32 %v1341, 0.0
      %v1465 = vmax.f32 %v1343, 0.0
      %v1466 = vmax.f32 %v1346, 0.0
      %v1467 = vmax.f32 %v1348, 0.0
      %v1468 = vmax.f32 %v1351, 0.0
      %v1469 = vmax.f32 %v1353, 0.0
      %v1470 = vmax.f32 %v1356, 0.0
      %v1471 = vmax.f32 %v1358, 0.0
      %v1472 = vmax.f32 %v1361, 0.0
      %v1473 = vmax.f32 %v1363, 0.0
      %v1474 = vmax.f32 %v1366, 0.0
      %v1475 = vmax.f32 %v1368, 0.0
      %v1476 = vmax.f32 %v1371, 0.0
      %v1477 = vmax.f32 %v1373, 0.0
      %v1478 = vmax.f32 %v1376, 0.0
      %v1479 = vmax.f32 %v1378, 0.0
      %v1480 = vmax.f32 %v1381, 0.0
      %v1481 = vmax.f32 %v1383, 0.0
      %v1482 = vmax.f32 %v1386, 0.0
      %v1483 = vmax.f32 %v1388, 0.0
      %v1484 = vmax.f32 %v1391, 0.0
      %v1485 = vmax.f32 %v1393, 0.0
      %v1486 = vmax.f32 %v1396, 0.0
      %v1487 = vmax.f32 %v1398, 0.0
      %v1488 = vmax.f32 %v1401, 0.0
      %v1489 = vmax.f32 %v1403, 0.0
      %v1490 = vmax.f32 %v1406, 0.0
      %v1491 = vmax.f32 %v1408, 0.0
      %v1492 = vmax.f32 %v1411, 0.0
      %v1493 = vmax.f32 %v1413, 0.0
      %v1494 = vmax.f32 %v1416, 0.0
      %v1495 = vmax.f32 %v1418, 0.0
      %v1496 = vmax.f32 %v1421, 0.0
      %v1497 = vmax.f32 %v1423, 0.0
      %v1498 = vmax.f32 %v1426, 0.0
      %v1499 = vmax.f32 %v1428, 0.0
      %v1500 = vmax.f32 %v1431, 0.0
      %v1501 = vmax.f32 %v1433, 0.0
      %v1502 = vmax.f32 %v1436, 0.0
      %v1503 = vmax.f32 %v1438, 0.0
      %v1504 = vld [vmem:[%s1 + $0xc0] sm:$0xf]
      %v1505 = vld [vmem:[%s1 + $0xc4] sm:$0xf]
      %v1506 = vld [vmem:[%s1 + $0xc8] sm:$0xf]
      %v1507 = vld [vmem:[%s1 + $0xcc] sm:$0xf]
      %v1508 = vld [vmem:[%s1 + $0xd0] sm:$0xf]
      %v1509 = vld [vmem:[%s1 + $0xd4] sm:$0xf]
      %v1510 = vld [vmem:[%s1 + $0xd8] sm:$0xf]
      %v1511 = vld [vmem:[%s1 + $0xdc] sm:$0xf]
      %v1512 = vld [vmem:[%s1 + $0xe0] sm:$0xf]
      %v1513 = vld [vmem:[%s1 + $0xe4] sm:$0xf]
      %v1514 = vld [vmem:[%s1 + $0xe8] sm:$0xf]
      %v1515 = vld [vmem:[%s1 + $0xec] sm:$0xf]
      %v1516 = vld [vmem:[%s1 + $0xf0] sm:$0xf]
      %v1517 = vld [vmem:[%s1 + $0xf4] sm:$0xf]
      %v1518 = vld [vmem:[%s1 + $0xf8] sm:$0xf]
      %v1519 = vld [vmem:[%s1 + $0xfc] sm:$0xf]
      %v1520 = vld [vmem:[%s2 + $0x3] sm:$0x1]
      %v1521 = vpack.c.bf16 %v1441, %v1440
      %v1522 = vpack.c.bf16 %v1443, %v1442
      %v1523 = vpack.c.bf16 %v1445, %v1444
      %v1524 = vpack.c.bf16 %v1447, %v1446
      %v1525 = vpack.c.bf16 %v1449, %v1448
      %v1526 = vpack.c.bf16 %v1451, %v1450
      %v1527 = vpack.c.bf16 %v1453, %v1452
      %v1528 = vpack.c.bf16 %v1455, %v1454
      %v1529 = vpack.c.bf16 %v1457, %v1456
      %v1530 = vpack.c.bf16 %v1459, %v1458
      %v1531 = vpack.c.bf16 %v1461, %v1460
      %v1532 = vpack.c.bf16 %v1463, %v1462
      %v1533 = vpack.c.bf16 %v1465, %v1464
      %v1534 = vpack.c.bf16 %v1467, %v1466
      %v1535 = vpack.c.bf16 %v1469, %v1468
      %v1536 = vpack.c.bf16 %v1471, %v1470
      %v1537 = vpack.c.bf16 %v1473, %v1472
      %v1538 = vpack.c.bf16 %v1475, %v1474
      %v1539 = vpack.c.bf16 %v1477, %v1476
      %v1540 = vpack.c.bf16 %v1479, %v1478
      %v1541 = vpack.c.bf16 %v1481, %v1480
      %v1542 = vpack.c.bf16 %v1483, %v1482
      %v1543 = vpack.c.bf16 %v1485, %v1484
      %v1544 = vpack.c.bf16 %v1487, %v1486
      %v1545 = vpack.c.bf16 %v1489, %v1488
      %v1546 = vpack.c.bf16 %v1491, %v1490
      %v1547 = vpack.c.bf16 %v1493, %v1492
      %v1548 = vpack.c.bf16 %v1495, %v1494
      %v1549 = vpack.c.bf16 %v1497, %v1496
      %v1550 = vpack.c.bf16 %v1499, %v1498
      %v1551 = vpack.c.bf16 %v1501, %v1500
      %v1552 = vpack.c.bf16 %v1503, %v1502
      %v1553 = vperm.slane %v1520, 0
      %v1570 = vunpack.c.l.b16 %v1504
      %v1571 = vunpack.c.l.b16 %v1505
      %v1572 = vunpack.c.l.b16 %v1506
      %v1573 = vunpack.c.l.b16 %v1507
      %v1574 = vunpack.c.l.b16 %v1508
      %v1575 = vunpack.c.l.b16 %v1509
      %v1576 = vunpack.c.l.b16 %v1510
      %v1577 = vunpack.c.l.b16 %v1511
      %v1578 = vunpack.c.l.b16 %v1512
      %v1579 = vunpack.c.l.b16 %v1513
      %v1580 = vunpack.c.l.b16 %v1514
      %v1581 = vunpack.c.l.b16 %v1515
      %v1582 = vunpack.c.l.b16 %v1516
      %v1583 = vunpack.c.l.b16 %v1517
      %v1584 = vunpack.c.l.b16 %v1518
      %v1585 = vunpack.c.l.b16 %v1519
      %v1586 = vpack.c.b16 %v1571, %v1570
      %v1587 = vpack.c.b16 %v1573, %v1572
      %v1588 = vpack.c.b16 %v1575, %v1574
      %v1589 = vpack.c.b16 %v1577, %v1576
      %v1590 = vpack.c.b16 %v1579, %v1578
      %v1591 = vpack.c.b16 %v1581, %v1580
      %v1592 = vpack.c.b16 %v1583, %v1582
      %v1593 = vpack.c.b16 %v1585, %v1584
      %1602 = vmatpush.bf16.msra.mxu0 %v1593
      %1603 = vmatpush.bf16.msra.mxu0 %v1592
      %1604 = vmatpush.bf16.msra.mxu0 %v1591
      %1605 = vmatpush.bf16.msra.mxu0 %v1590
      %1606 = vmatpush.bf16.msra.mxu0 %v1589
      %1607 = vmatpush.bf16.msra.mxu0 %v1588
      %1608 = vmatpush.bf16.msra.mxu0 %v1587
      %1609 = vmatpush.bf16.msra.mxu0 %v1586
      %1610 = vmatmul.bf16.gmra.mxu0 %v1521
      %v1611 = vpop.f32.mrf.mxu0
      %v1612 = vadd.f32 %v1553, %v1611
      %v1613 = vpop.f32.mrf.mxu0
      %v1614 = vadd.f32 %v1553, %v1613
      %1615 = vmatmul.bf16.gmra.mxu0 %v1522
      %v1616 = vpop.f32.mrf.mxu0
      %v1617 = vadd.f32 %v1553, %v1616
      %v1618 = vpop.f32.mrf.mxu0
      %v1619 = vadd.f32 %v1553, %v1618
      %1620 = vmatmul.bf16.gmra.mxu0 %v1523
      %v1621 = vpop.f32.mrf.mxu0
      %v1622 = vadd.f32 %v1553, %v1621
      %v1623 = vpop.f32.mrf.mxu0
      %v1624 = vadd.f32 %v1553, %v1623
      %1625 = vmatmul.bf16.gmra.mxu0 %v1524
      %v1626 = vpop.f32.mrf.mxu0
      %v1627 = vadd.f32 %v1553, %v1626
      %v1628 = vpop.f32.mrf.mxu0
      %v1629 = vadd.f32 %v1553, %v1628
      %1630 = vmatmul.bf16.gmra.mxu0 %v1525
      %v1631 = vpop.f32.mrf.mxu0
      %v1632 = vadd.f32 %v1553, %v1631
      %v1633 = vpop.f32.mrf.mxu0
      %v1634 = vadd.f32 %v1553, %v1633
      %1635 = vmatmul.bf16.gmra.mxu0 %v1526
      %v1636 = vpop.f32.mrf.mxu0
      %v1637 = vadd.f32 %v1553, %v1636
      %v1638 = vpop.f32.mrf.mxu0
      %v1639 = vadd.f32 %v1553, %v1638
      %1640 = vmatmul.bf16.gmra.mxu0 %v1527
      %v1641 = vpop.f32.mrf.mxu0
      %v1642 = vadd.f32 %v1553, %v1641
      %v1643 = vpop.f32.mrf.mxu0
      %v1644 = vadd.f32 %v1553, %v1643
      %1645 = vmatmul.bf16.gmra.mxu0 %v1528
      %v1646 = vpop.f32.mrf.mxu0
      %v1647 = vadd.f32 %v1553, %v1646
      %v1648 = vpop.f32.mrf.mxu0
      %v1649 = vadd.f32 %v1553, %v1648
      %1650 = vmatmul.bf16.gmra.mxu0 %v1529
      %v1651 = vpop.f32.mrf.mxu0
      %v1652 = vadd.f32 %v1553, %v1651
      %v1653 = vpop.f32.mrf.mxu0
      %v1654 = vadd.f32 %v1553, %v1653
      %1655 = vmatmul.bf16.gmra.mxu0 %v1530
      %v1656 = vpop.f32.mrf.mxu0
      %v1657 = vadd.f32 %v1553, %v1656
      %v1658 = vpop.f32.mrf.mxu0
      %v1659 = vadd.f32 %v1553, %v1658
      %1660 = vmatmul.bf16.gmra.mxu0 %v1531
      %v1661 = vpop.f32.mrf.mxu0
      %v1662 = vadd.f32 %v1553, %v1661
      %v1663 = vpop.f32.mrf.mxu0
      %v1664 = vadd.f32 %v1553, %v1663
      %1665 = vmatmul.bf16.gmra.mxu0 %v1532
      %v1666 = vpop.f32.mrf.mxu0
      %v1667 = vadd.f32 %v1553, %v1666
      %v1668 = vpop.f32.mrf.mxu0
      %v1669 = vadd.f32 %v1553, %v1668
      %1670 = vmatmul.bf16.gmra.mxu0 %v1533
      %v1671 = vpop.f32.mrf.mxu0
      %v1672 = vadd.f32 %v1553, %v1671
      %v1673 = vpop.f32.mrf.mxu0
      %v1674 = vadd.f32 %v1553, %v1673
      %1675 = vmatmul.bf16.gmra.mxu0 %v1534
      %v1676 = vpop.f32.mrf.mxu0
      %v1677 = vadd.f32 %v1553, %v1676
      %v1678 = vpop.f32.mrf.mxu0
      %v1679 = vadd.f32 %v1553, %v1678
      %1680 = vmatmul.bf16.gmra.mxu0 %v1535
      %v1681 = vpop.f32.mrf.mxu0
      %v1682 = vadd.f32 %v1553, %v1681
      %v1683 = vpop.f32.mrf.mxu0
      %v1684 = vadd.f32 %v1553, %v1683
      %1685 = vmatmul.bf16.gmra.mxu0 %v1536
      %v1686 = vpop.f32.mrf.mxu0
      %v1687 = vadd.f32 %v1553, %v1686
      %v1688 = vpop.f32.mrf.mxu0
      %v1689 = vadd.f32 %v1553, %v1688
      %1690 = vmatmul.bf16.gmra.mxu0 %v1537
      %v1691 = vpop.f32.mrf.mxu0
      %v1692 = vadd.f32 %v1553, %v1691
      %v1693 = vpop.f32.mrf.mxu0
      %v1694 = vadd.f32 %v1553, %v1693
      %1695 = vmatmul.bf16.gmra.mxu0 %v1538
      %v1696 = vpop.f32.mrf.mxu0
      %v1697 = vadd.f32 %v1553, %v1696
      %v1698 = vpop.f32.mrf.mxu0
      %v1699 = vadd.f32 %v1553, %v1698
      %1700 = vmatmul.bf16.gmra.mxu0 %v1539
      %v1701 = vpop.f32.mrf.mxu0
      %v1702 = vadd.f32 %v1553, %v1701
      %v1703 = vpop.f32.mrf.mxu0
      %v1704 = vadd.f32 %v1553, %v1703
      %1705 = vmatmul.bf16.gmra.mxu0 %v1540
      %v1706 = vpop.f32.mrf.mxu0
      %v1707 = vadd.f32 %v1553, %v1706
      %v1708 = vpop.f32.mrf.mxu0
      %v1709 = vadd.f32 %v1553, %v1708
      %1710 = vmatmul.bf16.gmra.mxu0 %v1541
      %v1711 = vpop.f32.mrf.mxu0
      %v1712 = vadd.f32 %v1553, %v1711
      %v1713 = vpop.f32.mrf.mxu0
      %v1714 = vadd.f32 %v1553, %v1713
      %1715 = vmatmul.bf16.gmra.mxu0 %v1542
      %v1716 = vpop.f32.mrf.mxu0
      %v1717 = vadd.f32 %v1553, %v1716
      %v1718 = vpop.f32.mrf.mxu0
      %v1719 = vadd.f32 %v1553, %v1718
      %1720 = vmatmul.bf16.gmra.mxu0 %v1543
      %v1721 = vpop.f32.mrf.mxu0
      %v1722 = vadd.f32 %v1553, %v1721
      %v1723 = vpop.f32.mrf.mxu0
      %v1724 = vadd.f32 %v1553, %v1723
      %1725 = vmatmul.bf16.gmra.mxu0 %v1544
      %v1726 = vpop.f32.mrf.mxu0
      %v1727 = vadd.f32 %v1553, %v1726
      %v1728 = vpop.f32.mrf.mxu0
      %v1729 = vadd.f32 %v1553, %v1728
      %1730 = vmatmul.bf16.gmra.mxu0 %v1545
      %v1731 = vpop.f32.mrf.mxu0
      %v1732 = vadd.f32 %v1553, %v1731
      %v1733 = vpop.f32.mrf.mxu0
      %v1734 = vadd.f32 %v1553, %v1733
      %1735 = vmatmul.bf16.gmra.mxu0 %v1546
      %v1736 = vpop.f32.mrf.mxu0
      %v1737 = vadd.f32 %v1553, %v1736
      %v1738 = vpop.f32.mrf.mxu0
      %v1739 = vadd.f32 %v1553, %v1738
      %1740 = vmatmul.bf16.gmra.mxu0 %v1547
      %v1741 = vpop.f32.mrf.mxu0
      %v1742 = vadd.f32 %v1553, %v1741
      %v1743 = vpop.f32.mrf.mxu0
      %v1744 = vadd.f32 %v1553, %v1743
      %1745 = vmatmul.bf16.gmra.mxu0 %v1548
      %v1746 = vpop.f32.mrf.mxu0
      %v1747 = vadd.f32 %v1553, %v1746
      %v1748 = vpop.f32.mrf.mxu0
      %v1749 = vadd.f32 %v1553, %v1748
      %1750 = vmatmul.bf16.gmra.mxu0 %v1549
      %v1751 = vpop.f32.mrf.mxu0
      %v1752 = vadd.f32 %v1553, %v1751
      %v1753 = vpop.f32.mrf.mxu0
      %v1754 = vadd.f32 %v1553, %v1753
      %1755 = vmatmul.bf16.gmra.mxu0 %v1550
      %v1756 = vpop.f32.mrf.mxu0
      %v1757 = vadd.f32 %v1553, %v1756
      %v1758 = vpop.f32.mrf.mxu0
      %v1759 = vadd.f32 %v1553, %v1758
      %1760 = vmatmul.bf16.gmra.mxu0 %v1551
      %v1761 = vpop.f32.mrf.mxu0
      %v1762 = vadd.f32 %v1553, %v1761
      %v1763 = vpop.f32.mrf.mxu0
      %v1764 = vadd.f32 %v1553, %v1763
      %1765 = vmatmul.bf16.gmra.mxu0 %v1552
      %v1766 = vpop.f32.mrf.mxu0
      %v1767 = vadd.f32 %v1553, %v1766
      %v1768 = vpop.f32.mrf.mxu0
      %v1769 = vadd.f32 %v1553, %v1768
      %1770 = vdwg.mxu0
      %v1771 = vmax.f32 %v1612, 0.0
      %v1772 = vmax.f32 %v1614, 0.0
      %v1773 = vmax.f32 %v1617, 0.0
      %v1774 = vmax.f32 %v1619, 0.0
      %v1775 = vmax.f32 %v1622, 0.0
      %v1776 = vmax.f32 %v1624, 0.0
      %v1777 = vmax.f32 %v1627, 0.0
      %v1778 = vmax.f32 %v1629, 0.0
      %v1779 = vmax.f32 %v1632, 0.0
      %v1780 = vmax.f32 %v1634, 0.0
      %v1781 = vmax.f32 %v1637, 0.0
      %v1782 = vmax.f32 %v1639, 0.0
      %v1783 = vmax.f32 %v1642, 0.0
      %v1784 = vmax.f32 %v1644, 0.0
      %v1785 = vmax.f32 %v1647, 0.0
      %v1786 = vmax.f32 %v1649, 0.0
      %v1787 = vmax.f32 %v1652, 0.0
      %v1788 = vmax.f32 %v1654, 0.0
      %v1789 = vmax.f32 %v1657, 0.0
      %v1790 = vmax.f32 %v1659, 0.0
      %v1791 = vmax.f32 %v1662, 0.0
      %v1792 = vmax.f32 %v1664, 0.0
      %v1793 = vmax.f32 %v1667, 0.0
      %v1794 = vmax.f32 %v1669, 0.0
      %v1795 = vmax.f32 %v1672, 0.0
      %v1796 = vmax.f32 %v1674, 0.0
      %v1797 = vmax.f32 %v1677, 0.0
      %v1798 = vmax.f32 %v1679, 0.0
      %v1799 = vmax.f32 %v1682, 0.0
      %v1800 = vmax.f32 %v1684, 0.0
      %v1801 = vmax.f32 %v1687, 0.0
      %v1802 = vmax.f32 %v1689, 0.0
      %v1803 = vmax.f32 %v1692, 0.0
      %v1804 = vmax.f32 %v1694, 0.0
      %v1805 = vmax.f32 %v1697, 0.0
      %v1806 = vmax.f32 %v1699, 0.0
      %v1807 = vmax.f32 %v1702, 0.0
      %v1808 = vmax.f32 %v1704, 0.0
      %v1809 = vmax.f32 %v1707, 0.0
      %v1810 = vmax.f32 %v1709, 0.0
      %v1811 = vmax.f32 %v1712, 0.0
      %v1812 = vmax.f32 %v1714, 0.0
      %v1813 = vmax.f32 %v1717, 0.0
      %v1814 = vmax.f32 %v1719, 0.0
      %v1815 = vmax.f32 %v1722, 0.0
      %v1816 = vmax.f32 %v1724, 0.0
      %v1817 = vmax.f32 %v1727, 0.0
      %v1818 = vmax.f32 %v1729, 0.0
      %v1819 = vmax.f32 %v1732, 0.0
      %v1820 = vmax.f32 %v1734, 0.0
      %v1821 = vmax.f32 %v1737, 0.0
      %v1822 = vmax.f32 %v1739, 0.0
      %v1823 = vmax.f32 %v1742, 0.0
      %v1824 = vmax.f32 %v1744, 0.0
      %v1825 = vmax.f32 %v1747, 0.0
      %v1826 = vmax.f32 %v1749, 0.0
      %v1827 = vmax.f32 %v1752, 0.0
      %v1828 = vmax.f32 %v1754, 0.0
      %v1829 = vmax.f32 %v1757, 0.0
      %v1830 = vmax.f32 %v1759, 0.0
      %v1831 = vmax.f32 %v1762, 0.0
      %v1832 = vmax.f32 %v1764, 0.0
      %v1833 = vmax.f32 %v1767, 0.0
      %v1834 = vmax.f32 %v1769, 0.0
      %v1835 = vld [vmem:[%s1 + $0x100] sm:$0xf]
      %v1836 = vld [vmem:[%s1 + $0x104] sm:$0xf]
      %v1837 = vld [vmem:[%s1 + $0x108] sm:$0xf]
      %v1838 = vld [vmem:[%s1 + $0x10c] sm:$0xf]
      %v1839 = vld [vmem:[%s1 + $0x110] sm:$0xf]
      %v1840 = vld [vmem:[%s1 + $0x114] sm:$0xf]
      %v1841 = vld [vmem:[%s1 + $0x118] sm:$0xf]
      %v1842 = vld [vmem:[%s1 + $0x11c] sm:$0xf]
      %v1843 = vld [vmem:[%s1 + $0x120] sm:$0xf]
      %v1844 = vld [vmem:[%s1 + $0x124] sm:$0xf]
      %v1845 = vld [vmem:[%s1 + $0x128] sm:$0xf]
      %v1846 = vld [vmem:[%s1 + $0x12c] sm:$0xf]
      %v1847 = vld [vmem:[%s1 + $0x130] sm:$0xf]
      %v1848 = vld [vmem:[%s1 + $0x134] sm:$0xf]
      %v1849 = vld [vmem:[%s1 + $0x138] sm:$0xf]
      %v1850 = vld [vmem:[%s1 + $0x13c] sm:$0xf]
      %v1851 = vld [vmem:[%s2 + $0x4] sm:$0x1]
      %v1852 = vpack.c.bf16 %v1772, %v1771
      %v1853 = vpack.c.bf16 %v1774, %v1773
      %v1854 = vpack.c.bf16 %v1776, %v1775
      %v1855 = vpack.c.bf16 %v1778, %v1777
      %v1856 = vpack.c.bf16 %v1780, %v1779
      %v1857 = vpack.c.bf16 %v1782, %v1781
      %v1858 = vpack.c.bf16 %v1784, %v1783
      %v1859 = vpack.c.bf16 %v1786, %v1785
      %v1860 = vpack.c.bf16 %v1788, %v1787
      %v1861 = vpack.c.bf16 %v1790, %v1789
      %v1862 = vpack.c.bf16 %v1792, %v1791
      %v1863 = vpack.c.bf16 %v1794, %v1793
      %v1864 = vpack.c.bf16 %v1796, %v1795
      %v1865 = vpack.c.bf16 %v1798, %v1797
      %v1866 = vpack.c.bf16 %v1800, %v1799
      %v1867 = vpack.c.bf16 %v1802, %v1801
      %v1868 = vpack.c.bf16 %v1804, %v1803
      %v1869 = vpack.c.bf16 %v1806, %v1805
      %v1870 = vpack.c.bf16 %v1808, %v1807
      %v1871 = vpack.c.bf16 %v1810, %v1809
      %v1872 = vpack.c.bf16 %v1812, %v1811
      %v1873 = vpack.c.bf16 %v1814, %v1813
      %v1874 = vpack.c.bf16 %v1816, %v1815
      %v1875 = vpack.c.bf16 %v1818, %v1817
      %v1876 = vpack.c.bf16 %v1820, %v1819
      %v1877 = vpack.c.bf16 %v1822, %v1821
      %v1878 = vpack.c.bf16 %v1824, %v1823
      %v1879 = vpack.c.bf16 %v1826, %v1825
      %v1880 = vpack.c.bf16 %v1828, %v1827
      %v1881 = vpack.c.bf16 %v1830, %v1829
      %v1882 = vpack.c.bf16 %v1832, %v1831
      %v1883 = vpack.c.bf16 %v1834, %v1833
      %v1884 = vperm.slane %v1851, 0
      %v1901 = vunpack.c.l.b16 %v1835
      %v1902 = vunpack.c.l.b16 %v1836
      %v1903 = vunpack.c.l.b16 %v1837
      %v1904 = vunpack.c.l.b16 %v1838
      %v1905 = vunpack.c.l.b16 %v1839
      %v1906 = vunpack.c.l.b16 %v1840
      %v1907 = vunpack.c.l.b16 %v1841
      %v1908 = vunpack.c.l.b16 %v1842
      %v1909 = vunpack.c.l.b16 %v1843
      %v1910 = vunpack.c.l.b16 %v1844
      %v1911 = vunpack.c.l.b16 %v1845
      %v1912 = vunpack.c.l.b16 %v1846
      %v1913 = vunpack.c.l.b16 %v1847
      %v1914 = vunpack.c.l.b16 %v1848
      %v1915 = vunpack.c.l.b16 %v1849
      %v1916 = vunpack.c.l.b16 %v1850
      %v1917 = vpack.c.b16 %v1902, %v1901
      %v1918 = vpack.c.b16 %v1904, %v1903
      %v1919 = vpack.c.b16 %v1906, %v1905
      %v1920 = vpack.c.b16 %v1908, %v1907
      %v1921 = vpack.c.b16 %v1910, %v1909
      %v1922 = vpack.c.b16 %v1912, %v1911
      %v1923 = vpack.c.b16 %v1914, %v1913
      %v1924 = vpack.c.b16 %v1916, %v1915
      %1933 = vmatpush.bf16.msra.mxu0 %v1924
      %1934 = vmatpush.bf16.msra.mxu0 %v1923
      %1935 = vmatpush.bf16.msra.mxu0 %v1922
      %1936 = vmatpush.bf16.msra.mxu0 %v1921
      %1937 = vmatpush.bf16.msra.mxu0 %v1920
      %1938 = vmatpush.bf16.msra.mxu0 %v1919
      %1939 = vmatpush.bf16.msra.mxu0 %v1918
      %1940 = vmatpush.bf16.msra.mxu0 %v1917
      %1941 = vmatmul.bf16.gmra.mxu0 %v1852
      %v1942 = vpop.f32.mrf.mxu0
      %v1943 = vadd.f32 %v1884, %v1942
      %v1944 = vpop.f32.mrf.mxu0
      %v1945 = vadd.f32 %v1884, %v1944
      %1946 = vmatmul.bf16.gmra.mxu0 %v1853
      %v1947 = vpop.f32.mrf.mxu0
      %v1948 = vadd.f32 %v1884, %v1947
      %v1949 = vpop.f32.mrf.mxu0
      %v1950 = vadd.f32 %v1884, %v1949
      %1951 = vmatmul.bf16.gmra.mxu0 %v1854
      %v1952 = vpop.f32.mrf.mxu0
      %v1953 = vadd.f32 %v1884, %v1952
      %v1954 = vpop.f32.mrf.mxu0
      %v1955 = vadd.f32 %v1884, %v1954
      %1956 = vmatmul.bf16.gmra.mxu0 %v1855
      %v1957 = vpop.f32.mrf.mxu0
      %v1958 = vadd.f32 %v1884, %v1957
      %v1959 = vpop.f32.mrf.mxu0
      %v1960 = vadd.f32 %v1884, %v1959
      %1961 = vmatmul.bf16.gmra.mxu0 %v1856
      %v1962 = vpop.f32.mrf.mxu0
      %v1963 = vadd.f32 %v1884, %v1962
      %v1964 = vpop.f32.mrf.mxu0
      %v1965 = vadd.f32 %v1884, %v1964
      %1966 = vmatmul.bf16.gmra.mxu0 %v1857
      %v1967 = vpop.f32.mrf.mxu0
      %v1968 = vadd.f32 %v1884, %v1967
      %v1969 = vpop.f32.mrf.mxu0
      %v1970 = vadd.f32 %v1884, %v1969
      %1971 = vmatmul.bf16.gmra.mxu0 %v1858
      %v1972 = vpop.f32.mrf.mxu0
      %v1973 = vadd.f32 %v1884, %v1972
      %v1974 = vpop.f32.mrf.mxu0
      %v1975 = vadd.f32 %v1884, %v1974
      %1976 = vmatmul.bf16.gmra.mxu0 %v1859
      %v1977 = vpop.f32.mrf.mxu0
      %v1978 = vadd.f32 %v1884, %v1977
      %v1979 = vpop.f32.mrf.mxu0
      %v1980 = vadd.f32 %v1884, %v1979
      %1981 = vmatmul.bf16.gmra.mxu0 %v1860
      %v1982 = vpop.f32.mrf.mxu0
      %v1983 = vadd.f32 %v1884, %v1982
      %v1984 = vpop.f32.mrf.mxu0
      %v1985 = vadd.f32 %v1884, %v1984
      %1986 = vmatmul.bf16.gmra.mxu0 %v1861
      %v1987 = vpop.f32.mrf.mxu0
      %v1988 = vadd.f32 %v1884, %v1987
      %v1989 = vpop.f32.mrf.mxu0
      %v1990 = vadd.f32 %v1884, %v1989
      %1991 = vmatmul.bf16.gmra.mxu0 %v1862
      %v1992 = vpop.f32.mrf.mxu0
      %v1993 = vadd.f32 %v1884, %v1992
      %v1994 = vpop.f32.mrf.mxu0
      %v1995 = vadd.f32 %v1884, %v1994
      %1996 = vmatmul.bf16.gmra.mxu0 %v1863
      %v1997 = vpop.f32.mrf.mxu0
      %v1998 = vadd.f32 %v1884, %v1997
      %v1999 = vpop.f32.mrf.mxu0
      %v2000 = vadd.f32 %v1884, %v1999
      %2001 = vmatmul.bf16.gmra.mxu0 %v1864
      %v2002 = vpop.f32.mrf.mxu0
      %v2003 = vadd.f32 %v1884, %v2002
      %v2004 = vpop.f32.mrf.mxu0
      %v2005 = vadd.f32 %v1884, %v2004
      %2006 = vmatmul.bf16.gmra.mxu0 %v1865
      %v2007 = vpop.f32.mrf.mxu0
      %v2008 = vadd.f32 %v1884, %v2007
      %v2009 = vpop.f32.mrf.mxu0
      %v2010 = vadd.f32 %v1884, %v2009
      %2011 = vmatmul.bf16.gmra.mxu0 %v1866
      %v2012 = vpop.f32.mrf.mxu0
      %v2013 = vadd.f32 %v1884, %v2012
      %v2014 = vpop.f32.mrf.mxu0
      %v2015 = vadd.f32 %v1884, %v2014
      %2016 = vmatmul.bf16.gmra.mxu0 %v1867
      %v2017 = vpop.f32.mrf.mxu0
      %v2018 = vadd.f32 %v1884, %v2017
      %v2019 = vpop.f32.mrf.mxu0
      %v2020 = vadd.f32 %v1884, %v2019
      %2021 = vmatmul.bf16.gmra.mxu0 %v1868
      %v2022 = vpop.f32.mrf.mxu0
      %v2023 = vadd.f32 %v1884, %v2022
      %v2024 = vpop.f32.mrf.mxu0
      %v2025 = vadd.f32 %v1884, %v2024
      %2026 = vmatmul.bf16.gmra.mxu0 %v1869
      %v2027 = vpop.f32.mrf.mxu0
      %v2028 = vadd.f32 %v1884, %v2027
      %v2029 = vpop.f32.mrf.mxu0
      %v2030 = vadd.f32 %v1884, %v2029
      %2031 = vmatmul.bf16.gmra.mxu0 %v1870
      %v2032 = vpop.f32.mrf.mxu0
      %v2033 = vadd.f32 %v1884, %v2032
      %v2034 = vpop.f32.mrf.mxu0
      %v2035 = vadd.f32 %v1884, %v2034
      %2036 = vmatmul.bf16.gmra.mxu0 %v1871
      %v2037 = vpop.f32.mrf.mxu0
      %v2038 = vadd.f32 %v1884, %v2037
      %v2039 = vpop.f32.mrf.mxu0
      %v2040 = vadd.f32 %v1884, %v2039
      %2041 = vmatmul.bf16.gmra.mxu0 %v1872
      %v2042 = vpop.f32.mrf.mxu0
      %v2043 = vadd.f32 %v1884, %v2042
      %v2044 = vpop.f32.mrf.mxu0
      %v2045 = vadd.f32 %v1884, %v2044
      %2046 = vmatmul.bf16.gmra.mxu0 %v1873
      %v2047 = vpop.f32.mrf.mxu0
      %v2048 = vadd.f32 %v1884, %v2047
      %v2049 = vpop.f32.mrf.mxu0
      %v2050 = vadd.f32 %v1884, %v2049
      %2051 = vmatmul.bf16.gmra.mxu0 %v1874
      %v2052 = vpop.f32.mrf.mxu0
      %v2053 = vadd.f32 %v1884, %v2052
      %v2054 = vpop.f32.mrf.mxu0
      %v2055 = vadd.f32 %v1884, %v2054
      %2056 = vmatmul.bf16.gmra.mxu0 %v1875
      %v2057 = vpop.f32.mrf.mxu0
      %v2058 = vadd.f32 %v1884, %v2057
      %v2059 = vpop.f32.mrf.mxu0
      %v2060 = vadd.f32 %v1884, %v2059
      %2061 = vmatmul.bf16.gmra.mxu0 %v1876
      %v2062 = vpop.f32.mrf.mxu0
      %v2063 = vadd.f32 %v1884, %v2062
      %v2064 = vpop.f32.mrf.mxu0
      %v2065 = vadd.f32 %v1884, %v2064
      %2066 = vmatmul.bf16.gmra.mxu0 %v1877
      %v2067 = vpop.f32.mrf.mxu0
      %v2068 = vadd.f32 %v1884, %v2067
      %v2069 = vpop.f32.mrf.mxu0
      %v2070 = vadd.f32 %v1884, %v2069
      %2071 = vmatmul.bf16.gmra.mxu0 %v1878
      %v2072 = vpop.f32.mrf.mxu0
      %v2073 = vadd.f32 %v1884, %v2072
      %v2074 = vpop.f32.mrf.mxu0
      %v2075 = vadd.f32 %v1884, %v2074
      %2076 = vmatmul.bf16.gmra.mxu0 %v1879
      %v2077 = vpop.f32.mrf.mxu0
      %v2078 = vadd.f32 %v1884, %v2077
      %v2079 = vpop.f32.mrf.mxu0
      %v2080 = vadd.f32 %v1884, %v2079
      %2081 = vmatmul.bf16.gmra.mxu0 %v1880
      %v2082 = vpop.f32.mrf.mxu0
      %v2083 = vadd.f32 %v1884, %v2082
      %v2084 = vpop.f32.mrf.mxu0
      %v2085 = vadd.f32 %v1884, %v2084
      %2086 = vmatmul.bf16.gmra.mxu0 %v1881
      %v2087 = vpop.f32.mrf.mxu0
      %v2088 = vadd.f32 %v1884, %v2087
      %v2089 = vpop.f32.mrf.mxu0
      %v2090 = vadd.f32 %v1884, %v2089
      %2091 = vmatmul.bf16.gmra.mxu0 %v1882
      %v2092 = vpop.f32.mrf.mxu0
      %v2093 = vadd.f32 %v1884, %v2092
      %v2094 = vpop.f32.mrf.mxu0
      %v2095 = vadd.f32 %v1884, %v2094
      %2096 = vmatmul.bf16.gmra.mxu0 %v1883
      %v2097 = vpop.f32.mrf.mxu0
      %v2098 = vadd.f32 %v1884, %v2097
      %v2099 = vpop.f32.mrf.mxu0
      %v2100 = vadd.f32 %v1884, %v2099
      %2101 = vdwg.mxu0
      %2102 = vmax.xlane.f32.xlu0 %v1943
      %v2103 = vpop.xlane.xlu0 %2102
      %2104 = vmax.xlane.f32.xlu0 %v1945
      %v2105 = vpop.xlane.xlu0 %2104
      %2106 = vmax.xlane.f32.xlu0 %v1948
      %v2107 = vpop.xlane.xlu0 %2106
      %2108 = vmax.xlane.f32.xlu0 %v1950
      %v2109 = vpop.xlane.xlu0 %2108
      %2110 = vmax.xlane.f32.xlu0 %v1953
      %v2111 = vpop.xlane.xlu0 %2110
      %2112 = vmax.xlane.f32.xlu0 %v1955
      %v2113 = vpop.xlane.xlu0 %2112
      %2114 = vmax.xlane.f32.xlu0 %v1958
      %v2115 = vpop.xlane.xlu0 %2114
      %2116 = vmax.xlane.f32.xlu0 %v1960
      %v2117 = vpop.xlane.xlu0 %2116
      %2118 = vmax.xlane.f32.xlu0 %v1963
      %v2119 = vpop.xlane.xlu0 %2118
      %2120 = vmax.xlane.f32.xlu0 %v1965
      %v2121 = vpop.xlane.xlu0 %2120
      %2122 = vmax.xlane.f32.xlu0 %v1968
      %v2123 = vpop.xlane.xlu0 %2122
      %2124 = vmax.xlane.f32.xlu0 %v1970
      %v2125 = vpop.xlane.xlu0 %2124
      %2126 = vmax.xlane.f32.xlu0 %v1973
      %v2127 = vpop.xlane.xlu0 %2126
      %2128 = vmax.xlane.f32.xlu0 %v1975
      %v2129 = vpop.xlane.xlu0 %2128
      %2130 = vmax.xlane.f32.xlu0 %v1978
      %v2131 = vpop.xlane.xlu0 %2130
      %2132 = vmax.xlane.f32.xlu0 %v1980
      %v2133 = vpop.xlane.xlu0 %2132
      %2134 = vmax.xlane.f32.xlu0 %v1983
      %v2135 = vpop.xlane.xlu0 %2134
      %2136 = vmax.xlane.f32.xlu0 %v1985
      %v2137 = vpop.xlane.xlu0 %2136
      %2138 = vmax.xlane.f32.xlu0 %v1988
      %v2139 = vpop.xlane.xlu0 %2138
      %2140 = vmax.xlane.f32.xlu0 %v1990
      %v2141 = vpop.xlane.xlu0 %2140
      %2142 = vmax.xlane.f32.xlu0 %v1993
      %v2143 = vpop.xlane.xlu0 %2142
      %2144 = vmax.xlane.f32.xlu0 %v1995
      %v2145 = vpop.xlane.xlu0 %2144
      %2146 = vmax.xlane.f32.xlu0 %v1998
      %v2147 = vpop.xlane.xlu0 %2146
      %2148 = vmax.xlane.f32.xlu0 %v2000
      %v2149 = vpop.xlane.xlu0 %2148
      %2150 = vmax.xlane.f32.xlu0 %v2003
      %v2151 = vpop.xlane.xlu0 %2150
      %2152 = vmax.xlane.f32.xlu0 %v2005
      %v2153 = vpop.xlane.xlu0 %2152
      %2154 = vmax.xlane.f32.xlu0 %v2008
      %v2155 = vpop.xlane.xlu0 %2154
      %2156 = vmax.xlane.f32.xlu0 %v2010
      %v2157 = vpop.xlane.xlu0 %2156
      %2158 = vmax.xlane.f32.xlu0 %v2013
      %v2159 = vpop.xlane.xlu0 %2158
      %2160 = vmax.xlane.f32.xlu0 %v2015
      %v2161 = vpop.xlane.xlu0 %2160
      %2162 = vmax.xlane.f32.xlu0 %v2018
      %v2163 = vpop.xlane.xlu0 %2162
      %2164 = vmax.xlane.f32.xlu0 %v2020
      %v2165 = vpop.xlane.xlu0 %2164
      %2166 = vmax.xlane.f32.xlu0 %v2023
      %v2167 = vpop.xlane.xlu0 %2166
      %2168 = vmax.xlane.f32.xlu0 %v2025
      %v2169 = vpop.xlane.xlu0 %2168
      %2170 = vmax.xlane.f32.xlu0 %v2028
      %v2171 = vpop.xlane.xlu0 %2170
      %2172 = vmax.xlane.f32.xlu0 %v2030
      %v2173 = vpop.xlane.xlu0 %2172
      %2174 = vmax.xlane.f32.xlu0 %v2033
      %v2175 = vpop.xlane.xlu0 %2174
      %2176 = vmax.xlane.f32.xlu0 %v2035
      %v2177 = vpop.xlane.xlu0 %2176
      %2178 = vmax.xlane.f32.xlu0 %v2038
      %v2179 = vpop.xlane.xlu0 %2178
      %2180 = vmax.xlane.f32.xlu0 %v2040
      %v2181 = vpop.xlane.xlu0 %2180
      %2182 = vmax.xlane.f32.xlu0 %v2043
      %v2183 = vpop.xlane.xlu0 %2182
      %2184 = vmax.xlane.f32.xlu0 %v2045
      %v2185 = vpop.xlane.xlu0 %2184
      %2186 = vmax.xlane.f32.xlu0 %v2048
      %v2187 = vpop.xlane.xlu0 %2186
      %2188 = vmax.xlane.f32.xlu0 %v2050
      %v2189 = vpop.xlane.xlu0 %2188
      %2190 = vmax.xlane.f32.xlu0 %v2053
      %v2191 = vpop.xlane.xlu0 %2190
      %2192 = vmax.xlane.f32.xlu0 %v2055
      %v2193 = vpop.xlane.xlu0 %2192
      %2194 = vmax.xlane.f32.xlu0 %v2058
      %v2195 = vpop.xlane.xlu0 %2194
      %2196 = vmax.xlane.f32.xlu0 %v2060
      %v2197 = vpop.xlane.xlu0 %2196
      %2198 = vmax.xlane.f32.xlu0 %v2063
      %v2199 = vpop.xlane.xlu0 %2198
      %2200 = vmax.xlane.f32.xlu0 %v2065
      %v2201 = vpop.xlane.xlu0 %2200
      %2202 = vmax.xlane.f32.xlu0 %v2068
      %v2203 = vpop.xlane.xlu0 %2202
      %2204 = vmax.xlane.f32.xlu0 %v2070
      %v2205 = vpop.xlane.xlu0 %2204
      %2206 = vmax.xlane.f32.xlu0 %v2073
      %v2207 = vpop.xlane.xlu0 %2206
      %2208 = vmax.xlane.f32.xlu0 %v2075
      %v2209 = vpop.xlane.xlu0 %2208
      %2210 = vmax.xlane.f32.xlu0 %v2078
      %v2211 = vpop.xlane.xlu0 %2210
      %2212 = vmax.xlane.f32.xlu0 %v2080
      %v2213 = vpop.xlane.xlu0 %2212
      %2214 = vmax.xlane.f32.xlu0 %v2083
      %v2215 = vpop.xlane.xlu0 %2214
      %2216 = vmax.xlane.f32.xlu0 %v2085
      %v2217 = vpop.xlane.xlu0 %2216
      %2218 = vmax.xlane.f32.xlu0 %v2088
      %v2219 = vpop.xlane.xlu0 %2218
      %2220 = vmax.xlane.f32.xlu0 %v2090
      %v2221 = vpop.xlane.xlu0 %2220
      %2222 = vmax.xlane.f32.xlu0 %v2093
      %v2223 = vpop.xlane.xlu0 %2222
      %2224 = vmax.xlane.f32.xlu0 %v2095
      %v2225 = vpop.xlane.xlu0 %2224
      %2226 = vmax.xlane.f32.xlu0 %v2098
      %v2227 = vpop.xlane.xlu0 %2226
      %2228 = vmax.xlane.f32.xlu0 %v2100
      %v2229 = vpop.xlane.xlu0 %2228
      %v2230 = vsub.f32 %v1943, %v2103
      %v2231 = vsub.f32 %v1945, %v2105
      %v2232 = vsub.f32 %v1948, %v2107
      %v2233 = vsub.f32 %v1950, %v2109
      %v2234 = vsub.f32 %v1953, %v2111
      %v2235 = vsub.f32 %v1955, %v2113
      %v2236 = vsub.f32 %v1958, %v2115
      %v2237 = vsub.f32 %v1960, %v2117
      %v2238 = vsub.f32 %v1963, %v2119
      %v2239 = vsub.f32 %v1965, %v2121
      %v2240 = vsub.f32 %v1968, %v2123
      %v2241 = vsub.f32 %v1970, %v2125
      %v2242 = vsub.f32 %v1973, %v2127
      %v2243 = vsub.f32 %v1975, %v2129
      %v2244 = vsub.f32 %v1978, %v2131
      %v2245 = vsub.f32 %v1980, %v2133
      %v2246 = vsub.f32 %v1983, %v2135
      %v2247 = vsub.f32 %v1985, %v2137
      %v2248 = vsub.f32 %v1988, %v2139
      %v2249 = vsub.f32 %v1990, %v2141
      %v2250 = vsub.f32 %v1993, %v2143
      %v2251 = vsub.f32 %v1995, %v2145
      %v2252 = vsub.f32 %v1998, %v2147
      %v2253 = vsub.f32 %v2000, %v2149
      %v2254 = vsub.f32 %v2003, %v2151
      %v2255 = vsub.f32 %v2005, %v2153
      %v2256 = vsub.f32 %v2008, %v2155
      %v2257 = vsub.f32 %v2010, %v2157
      %v2258 = vsub.f32 %v2013, %v2159
      %v2259 = vsub.f32 %v2015, %v2161
      %v2260 = vsub.f32 %v2018, %v2163
      %v2261 = vsub.f32 %v2020, %v2165
      %v2262 = vsub.f32 %v2023, %v2167
      %v2263 = vsub.f32 %v2025, %v2169
      %v2264 = vsub.f32 %v2028, %v2171
      %v2265 = vsub.f32 %v2030, %v2173
      %v2266 = vsub.f32 %v2033, %v2175
      %v2267 = vsub.f32 %v2035, %v2177
      %v2268 = vsub.f32 %v2038, %v2179
      %v2269 = vsub.f32 %v2040, %v2181
      %v2270 = vsub.f32 %v2043, %v2183
      %v2271 = vsub.f32 %v2045, %v2185
      %v2272 = vsub.f32 %v2048, %v2187
      %v2273 = vsub.f32 %v2050, %v2189
      %v2274 = vsub.f32 %v2053, %v2191
      %v2275 = vsub.f32 %v2055, %v2193
      %v2276 = vsub.f32 %v2058, %v2195
      %v2277 = vsub.f32 %v2060, %v2197
      %v2278 = vsub.f32 %v2063, %v2199
      %v2279 = vsub.f32 %v2065, %v2201
      %v2280 = vsub.f32 %v2068, %v2203
      %v2281 = vsub.f32 %v2070, %v2205
      %v2282 = vsub.f32 %v2073, %v2207
      %v2283 = vsub.f32 %v2075, %v2209
      %v2284 = vsub.f32 %v2078, %v2211
      %v2285 = vsub.f32 %v2080, %v2213
      %v2286 = vsub.f32 %v2083, %v2215
      %v2287 = vsub.f32 %v2085, %v2217
      %v2288 = vsub.f32 %v2088, %v2219
      %v2289 = vsub.f32 %v2090, %v2221
      %v2290 = vsub.f32 %v2093, %v2223
      %v2291 = vsub.f32 %v2095, %v2225
      %v2292 = vsub.f32 %v2098, %v2227
      %v2293 = vsub.f32 %v2100, %v2229
      %v2294 = vmul.f32 %v2230, 1.442695
      %v2295 = vpow.pop %v2294
      %v2296 = vmul.f32 %v2231, 1.442695
      %v2297 = vpow.pop %v2296
      %v2298 = vmul.f32 %v2232, 1.442695
      %v2299 = vpow.pop %v2298
      %v2300 = vmul.f32 %v2233, 1.442695
      %v2301 = vpow.pop %v2300
      %v2302 = vmul.f32 %v2234, 1.442695
      %v2303 = vpow.pop %v2302
      %v2304 = vmul.f32 %v2235, 1.442695
      %v2305 = vpow.pop %v2304
      %v2306 = vmul.f32 %v2236, 1.442695
      %v2307 = vpow.pop %v2306
      %v2308 = vmul.f32 %v2237, 1.442695
      %v2309 = vpow.pop %v2308
      %v2310 = vmul.f32 %v2238, 1.442695
      %v2311 = vpow.pop %v2310
      %v2312 = vmul.f32 %v2239, 1.442695
      %v2313 = vpow.pop %v2312
      %v2314 = vmul.f32 %v2240, 1.442695
      %v2315 = vpow.pop %v2314
      %v2316 = vmul.f32 %v2241, 1.442695
      %v2317 = vpow.pop %v2316
      %v2318 = vmul.f32 %v2242, 1.442695
      %v2319 = vpow.pop %v2318
      %v2320 = vmul.f32 %v2243, 1.442695
      %v2321 = vpow.pop %v2320
      %v2322 = vmul.f32 %v2244, 1.442695
      %v2323 = vpow.pop %v2322
      %v2324 = vmul.f32 %v2245, 1.442695
      %v2325 = vpow.pop %v2324
      %v2326 = vmul.f32 %v2246, 1.442695
      %v2327 = vpow.pop %v2326
      %v2328 = vmul.f32 %v2247, 1.442695
      %v2329 = vpow.pop %v2328
      %v2330 = vmul.f32 %v2248, 1.442695
      %v2331 = vpow.pop %v2330
      %v2332 = vmul.f32 %v2249, 1.442695
      %v2333 = vpow.pop %v2332
      %v2334 = vmul.f32 %v2250, 1.442695
      %v2335 = vpow.pop %v2334
      %v2336 = vmul.f32 %v2251, 1.442695
      %v2337 = vpow.pop %v2336
      %v2338 = vmul.f32 %v2252, 1.442695
      %v2339 = vpow.pop %v2338
      %v2340 = vmul.f32 %v2253, 1.442695
      %v2341 = vpow.pop %v2340
      %v2342 = vmul.f32 %v2254, 1.442695
      %v2343 = vpow.pop %v2342
      %v2344 = vmul.f32 %v2255, 1.442695
      %v2345 = vpow.pop %v2344
      %v2346 = vmul.f32 %v2256, 1.442695
      %v2347 = vpow.pop %v2346
      %v2348 = vmul.f32 %v2257, 1.442695
      %v2349 = vpow.pop %v2348
      %v2350 = vmul.f32 %v2258, 1.442695
      %v2351 = vpow.pop %v2350
      %v2352 = vmul.f32 %v2259, 1.442695
      %v2353 = vpow.pop %v2352
      %v2354 = vmul.f32 %v2260, 1.442695
      %v2355 = vpow.pop %v2354
      %v2356 = vmul.f32 %v2261, 1.442695
      %v2357 = vpow.pop %v2356
      %v2358 = vmul.f32 %v2262, 1.442695
      %v2359 = vpow.pop %v2358
      %v2360 = vmul.f32 %v2263, 1.442695
      %v2361 = vpow.pop %v2360
      %v2362 = vmul.f32 %v2264, 1.442695
      %v2363 = vpow.pop %v2362
      %v2364 = vmul.f32 %v2265, 1.442695
      %v2365 = vpow.pop %v2364
      %v2366 = vmul.f32 %v2266, 1.442695
      %v2367 = vpow.pop %v2366
      %v2368 = vmul.f32 %v2267, 1.442695
      %v2369 = vpow.pop %v2368
      %v2370 = vmul.f32 %v2268, 1.442695
      %v2371 = vpow.pop %v2370
      %v2372 = vmul.f32 %v2269, 1.442695
      %v2373 = vpow.pop %v2372
      %v2374 = vmul.f32 %v2270, 1.442695
      %v2375 = vpow.pop %v2374
      %v2376 = vmul.f32 %v2271, 1.442695
      %v2377 = vpow.pop %v2376
      %v2378 = vmul.f32 %v2272, 1.442695
      %v2379 = vpow.pop %v2378
      %v2380 = vmul.f32 %v2273, 1.442695
      %v2381 = vpow.pop %v2380
      %v2382 = vmul.f32 %v2274, 1.442695
      %v2383 = vpow.pop %v2382
      %v2384 = vmul.f32 %v2275, 1.442695
      %v2385 = vpow.pop %v2384
      %v2386 = vmul.f32 %v2276, 1.442695
      %v2387 = vpow.pop %v2386
      %v2388 = vmul.f32 %v2277, 1.442695
      %v2389 = vpow.pop %v2388
      %v2390 = vmul.f32 %v2278, 1.442695
      %v2391 = vpow.pop %v2390
      %v2392 = vmul.f32 %v2279, 1.442695
      %v2393 = vpow.pop %v2392
      %v2394 = vmul.f32 %v2280, 1.442695
      %v2395 = vpow.pop %v2394
      %v2396 = vmul.f32 %v2281, 1.442695
      %v2397 = vpow.pop %v2396
      %v2398 = vmul.f32 %v2282, 1.442695
      %v2399 = vpow.pop %v2398
      %v2400 = vmul.f32 %v2283, 1.442695
      %v2401 = vpow.pop %v2400
      %v2402 = vmul.f32 %v2284, 1.442695
      %v2403 = vpow.pop %v2402
      %v2404 = vmul.f32 %v2285, 1.442695
      %v2405 = vpow.pop %v2404
      %v2406 = vmul.f32 %v2286, 1.442695
      %v2407 = vpow.pop %v2406
      %v2408 = vmul.f32 %v2287, 1.442695
      %v2409 = vpow.pop %v2408
      %v2410 = vmul.f32 %v2288, 1.442695
      %v2411 = vpow.pop %v2410
      %v2412 = vmul.f32 %v2289, 1.442695
      %v2413 = vpow.pop %v2412
      %v2414 = vmul.f32 %v2290, 1.442695
      %v2415 = vpow.pop %v2414
      %v2416 = vmul.f32 %v2291, 1.442695
      %v2417 = vpow.pop %v2416
      %v2418 = vmul.f32 %v2292, 1.442695
      %v2419 = vpow.pop %v2418
      %v2420 = vmul.f32 %v2293, 1.442695
      %v2421 = vpow.pop %v2420
      %2422 = vadd.xlane.f32.xlu0 %v2295
      %v2423 = vpop.xlane.xlu0 %2422
      %2424 = vadd.xlane.f32.xlu0 %v2297
      %v2425 = vpop.xlane.xlu0 %2424
      %2426 = vadd.xlane.f32.xlu0 %v2299
      %v2427 = vpop.xlane.xlu0 %2426
      %2428 = vadd.xlane.f32.xlu0 %v2301
      %v2429 = vpop.xlane.xlu0 %2428
      %2430 = vadd.xlane.f32.xlu0 %v2303
      %v2431 = vpop.xlane.xlu0 %2430
      %2432 = vadd.xlane.f32.xlu0 %v2305
      %v2433 = vpop.xlane.xlu0 %2432
      %2434 = vadd.xlane.f32.xlu0 %v2307
      %v2435 = vpop.xlane.xlu0 %2434
      %2436 = vadd.xlane.f32.xlu0 %v2309
      %v2437 = vpop.xlane.xlu0 %2436
      %2438 = vadd.xlane.f32.xlu0 %v2311
      %v2439 = vpop.xlane.xlu0 %2438
      %2440 = vadd.xlane.f32.xlu0 %v2313
      %v2441 = vpop.xlane.xlu0 %2440
      %2442 = vadd.xlane.f32.xlu0 %v2315
      %v2443 = vpop.xlane.xlu0 %2442
      %2444 = vadd.xlane.f32.xlu0 %v2317
      %v2445 = vpop.xlane.xlu0 %2444
      %2446 = vadd.xlane.f32.xlu0 %v2319
      %v2447 = vpop.xlane.xlu0 %2446
      %2448 = vadd.xlane.f32.xlu0 %v2321
      %v2449 = vpop.xlane.xlu0 %2448
      %2450 = vadd.xlane.f32.xlu0 %v2323
      %v2451 = vpop.xlane.xlu0 %2450
      %2452 = vadd.xlane.f32.xlu0 %v2325
      %v2453 = vpop.xlane.xlu0 %2452
      %2454 = vadd.xlane.f32.xlu0 %v2327
      %v2455 = vpop.xlane.xlu0 %2454
      %2456 = vadd.xlane.f32.xlu0 %v2329
      %v2457 = vpop.xlane.xlu0 %2456
      %2458 = vadd.xlane.f32.xlu0 %v2331
      %v2459 = vpop.xlane.xlu0 %2458
      %2460 = vadd.xlane.f32.xlu0 %v2333
      %v2461 = vpop.xlane.xlu0 %2460
      %2462 = vadd.xlane.f32.xlu0 %v2335
      %v2463 = vpop.xlane.xlu0 %2462
      %2464 = vadd.xlane.f32.xlu0 %v2337
      %v2465 = vpop.xlane.xlu0 %2464
      %2466 = vadd.xlane.f32.xlu0 %v2339
      %v2467 = vpop.xlane.xlu0 %2466
      %2468 = vadd.xlane.f32.xlu0 %v2341
      %v2469 = vpop.xlane.xlu0 %2468
      %2470 = vadd.xlane.f32.xlu0 %v2343
      %v2471 = vpop.xlane.xlu0 %2470
      %2472 = vadd.xlane.f32.xlu0 %v2345
      %v2473 = vpop.xlane.xlu0 %2472
      %2474 = vadd.xlane.f32.xlu0 %v2347
      %v2475 = vpop.xlane.xlu0 %2474
      %2476 = vadd.xlane.f32.xlu0 %v2349
      %v2477 = vpop.xlane.xlu0 %2476
      %2478 = vadd.xlane.f32.xlu0 %v2351
      %v2479 = vpop.xlane.xlu0 %2478
      %2480 = vadd.xlane.f32.xlu0 %v2353
      %v2481 = vpop.xlane.xlu0 %2480
      %2482 = vadd.xlane.f32.xlu0 %v2355
      %v2483 = vpop.xlane.xlu0 %2482
      %2484 = vadd.xlane.f32.xlu0 %v2357
      %v2485 = vpop.xlane.xlu0 %2484
      %2486 = vadd.xlane.f32.xlu0 %v2359
      %v2487 = vpop.xlane.xlu0 %2486
      %2488 = vadd.xlane.f32.xlu0 %v2361
      %v2489 = vpop.xlane.xlu0 %2488
      %2490 = vadd.xlane.f32.xlu0 %v2363
      %v2491 = vpop.xlane.xlu0 %2490
      %2492 = vadd.xlane.f32.xlu0 %v2365
      %v2493 = vpop.xlane.xlu0 %2492
      %2494 = vadd.xlane.f32.xlu0 %v2367
      %v2495 = vpop.xlane.xlu0 %2494
      %2496 = vadd.xlane.f32.xlu0 %v2369
      %v2497 = vpop.xlane.xlu0 %2496
      %2498 = vadd.xlane.f32.xlu0 %v2371
      %v2499 = vpop.xlane.xlu0 %2498
      %2500 = vadd.xlane.f32.xlu0 %v2373
      %v2501 = vpop.xlane.xlu0 %2500
      %2502 = vadd.xlane.f32.xlu0 %v2375
      %v2503 = vpop.xlane.xlu0 %2502
      %2504 = vadd.xlane.f32.xlu0 %v2377
      %v2505 = vpop.xlane.xlu0 %2504
      %2506 = vadd.xlane.f32.xlu0 %v2379
      %v2507 = vpop.xlane.xlu0 %2506
      %2508 = vadd.xlane.f32.xlu0 %v2381
      %v2509 = vpop.xlane.xlu0 %2508
      %2510 = vadd.xlane.f32.xlu0 %v2383
      %v2511 = vpop.xlane.xlu0 %2510
      %2512 = vadd.xlane.f32.xlu0 %v2385
      %v2513 = vpop.xlane.xlu0 %2512
      %2514 = vadd.xlane.f32.xlu0 %v2387
      %v2515 = vpop.xlane.xlu0 %2514
      %2516 = vadd.xlane.f32.xlu0 %v2389
      %v2517 = vpop.xlane.xlu0 %2516
      %2518 = vadd.xlane.f32.xlu0 %v2391
      %v2519 = vpop.xlane.xlu0 %2518
      %2520 = vadd.xlane.f32.xlu0 %v2393
      %v2521 = vpop.xlane.xlu0 %2520
      %2522 = vadd.xlane.f32.xlu0 %v2395
      %v2523 = vpop.xlane.xlu0 %2522
      %2524 = vadd.xlane.f32.xlu0 %v2397
      %v2525 = vpop.xlane.xlu0 %2524
      %2526 = vadd.xlane.f32.xlu0 %v2399
      %v2527 = vpop.xlane.xlu0 %2526
      %2528 = vadd.xlane.f32.xlu0 %v2401
      %v2529 = vpop.xlane.xlu0 %2528
      %2530 = vadd.xlane.f32.xlu0 %v2403
      %v2531 = vpop.xlane.xlu0 %2530
      %2532 = vadd.xlane.f32.xlu0 %v2405
      %v2533 = vpop.xlane.xlu0 %2532
      %2534 = vadd.xlane.f32.xlu0 %v2407
      %v2535 = vpop.xlane.xlu0 %2534
      %2536 = vadd.xlane.f32.xlu0 %v2409
      %v2537 = vpop.xlane.xlu0 %2536
      %2538 = vadd.xlane.f32.xlu0 %v2411
      %v2539 = vpop.xlane.xlu0 %2538
      %2540 = vadd.xlane.f32.xlu0 %v2413
      %v2541 = vpop.xlane.xlu0 %2540
      %2542 = vadd.xlane.f32.xlu0 %v2415
      %v2543 = vpop.xlane.xlu0 %2542
      %2544 = vadd.xlane.f32.xlu0 %v2417
      %v2545 = vpop.xlane.xlu0 %2544
      %2546 = vadd.xlane.f32.xlu0 %v2419
      %v2547 = vpop.xlane.xlu0 %2546
      %2548 = vadd.xlane.f32.xlu0 %v2421
      %v2549 = vpop.xlane.xlu0 %2548
      %v2550 = vrcp.pop %v2423
      %v2551 = vrcp.pop %v2425
      %v2552 = vrcp.pop %v2427
      %v2553 = vrcp.pop %v2429
      %v2554 = vrcp.pop %v2431
      %v2555 = vrcp.pop %v2433
      %v2556 = vrcp.pop %v2435
      %v2557 = vrcp.pop %v2437
      %v2558 = vrcp.pop %v2439
      %v2559 = vrcp.pop %v2441
      %v2560 = vrcp.pop %v2443
      %v2561 = vrcp.pop %v2445
      %v2562 = vrcp.pop %v2447
      %v2563 = vrcp.pop %v2449
      %v2564 = vrcp.pop %v2451
      %v2565 = vrcp.pop %v2453
      %v2566 = vrcp.pop %v2455
      %v2567 = vrcp.pop %v2457
      %v2568 = vrcp.pop %v2459
      %v2569 = vrcp.pop %v2461
      %v2570 = vrcp.pop %v2463
      %v2571 = vrcp.pop %v2465
      %v2572 = vrcp.pop %v2467
      %v2573 = vrcp.pop %v2469
      %v2574 = vrcp.pop %v2471
      %v2575 = vrcp.pop %v2473
      %v2576 = vrcp.pop %v2475
      %v2577 = vrcp.pop %v2477
      %v2578 = vrcp.pop %v2479
      %v2579 = vrcp.pop %v2481
      %v2580 = vrcp.pop %v2483
      %v2581 = vrcp.pop %v2485
      %v2582 = vrcp.pop %v2487
      %v2583 = vrcp.pop %v2489
      %v2584 = vrcp.pop %v2491
      %v2585 = vrcp.pop %v2493
      %v2586 = vrcp.pop %v2495
      %v2587 = vrcp.pop %v2497
      %v2588 = vrcp.pop %v2499
      %v2589 = vrcp.pop %v2501
      %v2590 = vrcp.pop %v2503
      %v2591 = vrcp.pop %v2505
      %v2592 = vrcp.pop %v2507
      %v2593 = vrcp.pop %v2509
      %v2594 = vrcp.pop %v2511
      %v2595 = vrcp.pop %v2513
      %v2596 = vrcp.pop %v2515
      %v2597 = vrcp.pop %v2517
      %v2598 = vrcp.pop %v2519
      %v2599 = vrcp.pop %v2521
      %v2600 = vrcp.pop %v2523
      %v2601 = vrcp.pop %v2525
      %v2602 = vrcp.pop %v2527
      %v2603 = vrcp.pop %v2529
      %v2604 = vrcp.pop %v2531
      %v2605 = vrcp.pop %v2533
      %v2606 = vrcp.pop %v2535
      %v2607 = vrcp.pop %v2537
      %v2608 = vrcp.pop %v2539
      %v2609 = vrcp.pop %v2541
      %v2610 = vrcp.pop %v2543
      %v2611 = vrcp.pop %v2545
      %v2612 = vrcp.pop %v2547
      %v2613 = vrcp.pop %v2549
      %v2614 = vmul.f32 %v2295, %v2550
      %v2615 = vmul.f32 %v2297, %v2551
      %v2616 = vmul.f32 %v2299, %v2552
      %v2617 = vmul.f32 %v2301, %v2553
      %v2618 = vmul.f32 %v2303, %v2554
      %v2619 = vmul.f32 %v2305, %v2555
      %v2620 = vmul.f32 %v2307, %v2556
      %v2621 = vmul.f32 %v2309, %v2557
      %v2622 = vmul.f32 %v2311, %v2558
      %v2623 = vmul.f32 %v2313, %v2559
      %v2624 = vmul.f32 %v2315, %v2560
      %v2625 = vmul.f32 %v2317, %v2561
      %v2626 = vmul.f32 %v2319, %v2562
      %v2627 = vmul.f32 %v2321, %v2563
      %v2628 = vmul.f32 %v2323, %v2564
      %v2629 = vmul.f32 %v2325, %v2565
      %v2630 = vmul.f32 %v2327, %v2566
      %v2631 = vmul.f32 %v2329, %v2567
      %v2632 = vmul.f32 %v2331, %v2568
      %v2633 = vmul.f32 %v2333, %v2569
      %v2634 = vmul.f32 %v2335, %v2570
      %v2635 = vmul.f32 %v2337, %v2571
      %v2636 = vmul.f32 %v2339, %v2572
      %v2637 = vmul.f32 %v2341, %v2573
      %v2638 = vmul.f32 %v2343, %v2574
      %v2639 = vmul.f32 %v2345, %v2575
      %v2640 = vmul.f32 %v2347, %v2576
      %v2641 = vmul.f32 %v2349, %v2577
      %v2642 = vmul.f32 %v2351, %v2578
      %v2643 = vmul.f32 %v2353, %v2579
      %v2644 = vmul.f32 %v2355, %v2580
      %v2645 = vmul.f32 %v2357, %v2581
      %v2646 = vmul.f32 %v2359, %v2582
      %v2647 = vmul.f32 %v2361, %v2583
      %v2648 = vmul.f32 %v2363, %v2584
      %v2649 = vmul.f32 %v2365, %v2585
      %v2650 = vmul.f32 %v2367, %v2586
      %v2651 = vmul.f32 %v2369, %v2587
      %v2652 = vmul.f32 %v2371, %v2588
      %v2653 = vmul.f32 %v2373, %v2589
      %v2654 = vmul.f32 %v2375, %v2590
      %v2655 = vmul.f32 %v2377, %v2591
      %v2656 = vmul.f32 %v2379, %v2592
      %v2657 = vmul.f32 %v2381, %v2593
      %v2658 = vmul.f32 %v2383, %v2594
      %v2659 = vmul.f32 %v2385, %v2595
      %v2660 = vmul.f32 %v2387, %v2596
      %v2661 = vmul.f32 %v2389, %v2597
      %v2662 = vmul.f32 %v2391, %v2598
      %v2663 = vmul.f32 %v2393, %v2599
      %v2664 = vmul.f32 %v2395, %v2600
      %v2665 = vmul.f32 %v2397, %v2601
      %v2666 = vmul.f32 %v2399, %v2602
      %v2667 = vmul.f32 %v2401, %v2603
      %v2668 = vmul.f32 %v2403, %v2604
      %v2669 = vmul.f32 %v2405, %v2605
      %v2670 = vmul.f32 %v2407, %v2606
      %v2671 = vmul.f32 %v2409, %v2607
      %v2672 = vmul.f32 %v2411, %v2608
      %v2673 = vmul.f32 %v2413, %v2609
      %v2674 = vmul.f32 %v2415, %v2610
      %v2675 = vmul.f32 %v2417, %v2611
      %v2676 = vmul.f32 %v2419, %v2612
      %v2677 = vmul.f32 %v2421, %v2613
      %vm2678 = vcmask 64512
      %2679 = vst.msk [vmem:[%s199] sm:$0xff] %vm2678, %v2614
      %2680 = vst.msk [vmem:[%s199 + $0x8] sm:$0xff] %vm2678, %v2615
      %2681 = vst.msk [vmem:[%s199 + $0x10] sm:$0xff] %vm2678, %v2616
      %2682 = vst.msk [vmem:[%s199 + $0x18] sm:$0xff] %vm2678, %v2617
      %2683 = vst.msk [vmem:[%s199 + $0x20] sm:$0xff] %vm2678, %v2618
      %2684 = vst.msk [vmem:[%s199 + $0x28] sm:$0xff] %vm2678, %v2619
      %2685 = vst.msk [vmem:[%s199 + $0x30] sm:$0xff] %vm2678, %v2620
      %2686 = vst.msk [vmem:[%s199 + $0x38] sm:$0xff] %vm2678, %v2621
      %2687 = vst.msk [vmem:[%s199 + $0x40] sm:$0xff] %vm2678, %v2622
      %2688 = vst.msk [vmem:[%s199 + $0x48] sm:$0xff] %vm2678, %v2623
      %2689 = vst.msk [vmem:[%s199 + $0x50] sm:$0xff] %vm2678, %v2624
      %2690 = vst.msk [vmem:[%s199 + $0x58] sm:$0xff] %vm2678, %v2625
      %2691 = vst.msk [vmem:[%s199 + $0x60] sm:$0xff] %vm2678, %v2626
      %2692 = vst.msk [vmem:[%s199 + $0x68] sm:$0xff] %vm2678, %v2627
      %2693 = vst.msk [vmem:[%s199 + $0x70] sm:$0xff] %vm2678, %v2628
      %2694 = vst.msk [vmem:[%s199 + $0x78] sm:$0xff] %vm2678, %v2629
      %2695 = vst.msk [vmem:[%s199 + $0x80] sm:$0xff] %vm2678, %v2630
      %2696 = vst.msk [vmem:[%s199 + $0x88] sm:$0xff] %vm2678, %v2631
      %2697 = vst.msk [vmem:[%s199 + $0x90] sm:$0xff] %vm2678, %v2632
      %2698 = vst.msk [vmem:[%s199 + $0x98] sm:$0xff] %vm2678, %v2633
      %2699 = vst.msk [vmem:[%s199 + $0xa0] sm:$0xff] %vm2678, %v2634
      %2700 = vst.msk [vmem:[%s199 + $0xa8] sm:$0xff] %vm2678, %v2635
      %2701 = vst.msk [vmem:[%s199 + $0xb0] sm:$0xff] %vm2678, %v2636
      %2702 = vst.msk [vmem:[%s199 + $0xb8] sm:$0xff] %vm2678, %v2637
      %2703 = vst.msk [vmem:[%s199 + $0xc0] sm:$0xff] %vm2678, %v2638
      %2704 = vst.msk [vmem:[%s199 + $0xc8] sm:$0xff] %vm2678, %v2639
      %2705 = vst.msk [vmem:[%s199 + $0xd0] sm:$0xff] %vm2678, %v2640
      %2706 = vst.msk [vmem:[%s199 + $0xd8] sm:$0xff] %vm2678, %v2641
      %2707 = vst.msk [vmem:[%s199 + $0xe0] sm:$0xff] %vm2678, %v2642
      %2708 = vst.msk [vmem:[%s199 + $0xe8] sm:$0xff] %vm2678, %v2643
      %2709 = vst.msk [vmem:[%s199 + $0xf0] sm:$0xff] %vm2678, %v2644
      %2710 = vst.msk [vmem:[%s199 + $0xf8] sm:$0xff] %vm2678, %v2645
      %2711 = vst.msk [vmem:[%s199 + $0x100] sm:$0xff] %vm2678, %v2646
      %2712 = vst.msk [vmem:[%s199 + $0x108] sm:$0xff] %vm2678, %v2647
      %2713 = vst.msk [vmem:[%s199 + $0x110] sm:$0xff] %vm2678, %v2648
      %2714 = vst.msk [vmem:[%s199 + $0x118] sm:$0xff] %vm2678, %v2649
      %2715 = vst.msk [vmem:[%s199 + $0x120] sm:$0xff] %vm2678, %v2650
      %2716 = vst.msk [vmem:[%s199 + $0x128] sm:$0xff] %vm2678, %v2651
      %2717 = vst.msk [vmem:[%s199 + $0x130] sm:$0xff] %vm2678, %v2652
      %2718 = vst.msk [vmem:[%s199 + $0x138] sm:$0xff] %vm2678, %v2653
      %2719 = vst.msk [vmem:[%s199 + $0x140] sm:$0xff] %vm2678, %v2654
      %2720 = vst.msk [vmem:[%s199 + $0x148] sm:$0xff] %vm2678, %v2655
      %2721 = vst.msk [vmem:[%s199 + $0x150] sm:$0xff] %vm2678, %v2656
      %2722 = vst.msk [vmem:[%s199 + $0x158] sm:$0xff] %vm2678, %v2657
      %2723 = vst.msk [vmem:[%s199 + $0x160] sm:$0xff] %vm2678, %v2658
      %2724 = vst.msk [vmem:[%s199 + $0x168] sm:$0xff] %vm2678, %v2659
      %2725 = vst.msk [vmem:[%s199 + $0x170] sm:$0xff] %vm2678, %v2660
      %2726 = vst.msk [vmem:[%s199 + $0x178] sm:$0xff] %vm2678, %v2661
      %2727 = vst.msk [vmem:[%s199 + $0x180] sm:$0xff] %vm2678, %v2662
      %2728 = vst.msk [vmem:[%s199 + $0x188] sm:$0xff] %vm2678, %v2663
      %2729 = vst.msk [vmem:[%s199 + $0x190] sm:$0xff] %vm2678, %v2664
      %2730 = vst.msk [vmem:[%s199 + $0x198] sm:$0xff] %vm2678, %v2665
      %2731 = vst.msk [vmem:[%s199 + $0x1a0] sm:$0xff] %vm2678, %v2666
      %2732 = vst.msk [vmem:[%s199 + $0x1a8] sm:$0xff] %vm2678, %v2667
      %2733 = vst.msk [vmem:[%s199 + $0x1b0] sm:$0xff] %vm2678, %v2668
      %2734 = vst.msk [vmem:[%s199 + $0x1b8] sm:$0xff] %vm2678, %v2669
      %2735 = vst.msk [vmem:[%s199 + $0x1c0] sm:$0xff] %vm2678, %v2670
      %2736 = vst.msk [vmem:[%s199 + $0x1c8] sm:$0xff] %vm2678, %v2671
      %2737 = vst.msk [vmem:[%s199 + $0x1d0] sm:$0xff] %vm2678, %v2672
      %2738 = vst.msk [vmem:[%s199 + $0x1d8] sm:$0xff] %vm2678, %v2673
      %2739 = vst.msk [vmem:[%s199 + $0x1e0] sm:$0xff] %vm2678, %v2674
      %2740 = vst.msk [vmem:[%s199 + $0x1e8] sm:$0xff] %vm2678, %v2675
      %2741 = vst.msk [vmem:[%s199 + $0x1f0] sm:$0xff] %vm2678, %v2676
      %2742 = vst.msk [vmem:[%s199 + $0x1f8] sm:$0xff] %vm2678, %v2677
      %s2743 = smul.u32 64, %s15
      %p2744 = scmp.lt.s32.totalorder %s2743, 127
      %s2745 = scalar_select %p2744, %s2743, 127
      %s2746 = smul.addr %s2745, 8
      %s2747 = scalar_lea.vmem %s4, %s2746
      // Predicated region
      $region37: #{tpu_custom_call.1} parent=35 // pred_check
        %p2748 = pneg %p122
      $region38: #{tpu_custom_call.1} parent=35 // pred_check_branch
        %2750 = sbr.rel (%p2748) target = $region40
      $region39: #{tpu_custom_call.1} parent=35 // pred_region
        %s2751 = smul.u32 64, %s15
      $region40: #{tpu_custom_call.1} parent=35 // pred_fallthru
        _
    $region36: #{tpu_custom_call.1} parent=5 // pred_fallthru
      _
    %p2752 = scmp.le.s32.totalorder 2, %s10
    // Predicated region
    $region41: #{tpu_custom_call.1} parent=5 // pred_check
      %p2753 = pneg %p2752
    $region42: #{tpu_custom_call.1} parent=5 // pred_check_branch
      %2755 = sbr.rel (%p2753) target = $region44
    $region43: #{tpu_custom_call.1} parent=5 // pred_region
      %s2756 = ssub.s32 %s10, 2
      // Predicated region
      $region45: #{tpu_custom_call.1} parent=43 // pred_check
        %p2757 = pneg %p128
      $region46: #{tpu_custom_call.1} parent=43 // pred_check_branch
        %2759 = sbr.rel (%p2757) target = $region48
      $region47: #{tpu_custom_call.1} parent=43 // pred_region
        %s2760 = smul.u32 64, %s16
        %p2761 = scmp.lt.s32.totalorder %s2760, 127
        %s2762 = scalar_select %p2761, %s2760, 127
        %s2763 = smul.addr %s2762, 8
        %s2764 = scalar_lea.vmem %s4, %s2763
      $region48: #{tpu_custom_call.1} parent=43 // pred_fallthru
        _
    $region44: #{tpu_custom_call.1} parent=5 // pred_fallthru
      _
  $region6: #{tpu_custom_call.1} parent=0 // loop_footer
    %s14 = sadd.s32 1, %s10
  $region7: #{tpu_custom_call.1} parent=0 // loop_footer_branch
    %9 = sbr.rel target = $region3
  $region8: #{tpu_custom_call.1} parent=0 // loop_exit
    _

</llo_original>
